<compile_context>
chip_gen: v7x
topology: tpu7x:2x2x1
jax: 0.10.0
libtpu: 0.0.40
codegen_flags: <defaults>
</compile_context>

<pallas_src>
import functools

import jax
import jax.numpy as jnp
from jax.experimental import pallas as pl
from jax.experimental.pallas import tpu as pltpu


def _leaky_relu(x, slope=0.01):
    # PyTorch nn.LeakyReLU default negative_slope = 0.01
    return jnp.where(x >= 0, x, slope * x)


def _gmm_kernel(M, K,
                x_ref,
                w1_ref, b1_ref,                  # fused first layer (18M,6M),(18M,1)
                s_w2, s_b2, s_w3, s_b3,
                m_w2, m_b2, m_w3, m_b3,
                w_w2, w_b2, w_w3, w_b3,
                sigma_ref, means_ref, weights_ref):
    C6 = 6 * M
    mm_dtype = w1_ref.dtype                      # bf16 (perf) or f32 (validation)

    def dot32(w_ref, h):
        # MXU matmul with low-precision operands, f32 accumulation.
        return jnp.dot(w_ref[...], h.astype(mm_dtype),
                       preferred_element_type=jnp.float32)

    x = x_ref[...]                               # (6M, TP)  channels x pixels

    # ---- fused first layer for all three branches (all consume x) -----------
    h1 = dot32(w1_ref, x) + b1_ref[...]          # (18M, TP), f32
    hs = jnp.maximum(h1[0 * C6:1 * C6, :], 0.0)  # sigma branch   (ReLU)
    hm = _leaky_relu(h1[1 * C6:2 * C6, :])       # means branch   (LeakyReLU)
    hw = _leaky_relu(h1[2 * C6:3 * C6, :])       # weights branch (LeakyReLU)

    # ---- sigma branch: ReLU after every layer --------------------------------
    h = jnp.maximum(dot32(s_w2, hs) + s_b2[...], 0.0)
    h = jnp.maximum(dot32(s_w3, h) + s_b3[...], 0.0)
    sigma_ref[...] = h.astype(sigma_ref.dtype)

    # ---- means branch: LeakyReLU, LeakyReLU, linear ---------------------------
    h = _leaky_relu(dot32(m_w2, hm) + m_b2[...])
    h = dot32(m_w3, h) + m_b3[...]
    means_ref[...] = h.astype(means_ref.dtype)

    # ---- weights branch: LeakyReLU, LeakyReLU, linear, softmax over K --------
    h = _leaky_relu(dot32(w_w2, hw) + w_b2[...])
    wlog = dot32(w_w3, h) + w_b3[...]            # (MK, TP), f32

    # channel index c = k*M + m ; softmax over k for every (m, pixel).
    mx = wlog[0:M, :]
    for k in range(1, K):
        mx = jnp.maximum(mx, wlog[k * M:(k + 1) * M, :])
    e = jnp.exp(wlog - jnp.concatenate([mx] * K, axis=0))   # (MK, TP)
    den = e[0:M, :]
    for k in range(1, K):
        den = den + e[k * M:(k + 1) * M, :]
    inv = 1.0 / den                              # exact; approx vrcp broke 1e-3
    weights_ref[...] = (e * jnp.concatenate([inv] * K, axis=0)
                        ).astype(weights_ref.dtype)


def _choose_tile_p(HW, B, per_px_bytes, target=2048, vmem_budget_bytes=24 * 2**20):
    """Lane-dense pixel tile (multiple of 128) capped by a per-step VMEM budget.

    Ragged last blocks are left to the pl.cdiv grid (Pallas masks the
    writeback), so no full-HW bail-out is needed for non-128-multiple H*W.
    """
    cap = max(128, (int(vmem_budget_bytes // per_px_bytes) // 128) * 128)
    tp = min(target, cap)
    if tp >= HW:
        return HW                                 # single full-extent block
    tp = max(128, tp - tp % 128)
    # >=4 grid steps mainly helps v7x's 2 TensorCores; never shrink below 512 so
    # single-TC v5e/v6e keep large DMAs (~85% of HBM roofline).
    while tp > 512 and B * ((HW + tp - 1) // tp) < 4:
        tp = max(512, ((tp // 2) // 128) * 128)
    return tp


def pack_gmm_params(params, *, M, K, matmul_dtype=jnp.bfloat16):
    """Transpose every layer to (C_out, C_in), fuse the three first layers, and
    cast the weights to `matmul_dtype` (biases stay f32).  Call ONCE, reuse."""
    del M, K  # shapes are implicit in the param dict

    def wt(name):
        return params[name].T.astype(matmul_dtype)      # (C_out, C_in)

    def bt(name):
        return params[name].reshape(-1, 1).astype(jnp.float32)   # (C_out, 1)

    w1 = jnp.concatenate([wt("sigma_w1"), wt("means_w1"), wt("weights_w1")], axis=0)
    b1 = jnp.concatenate([bt("sigma_b1"), bt("means_b1"), bt("weights_b1")], axis=0)
    packed = [w1, b1]
    for branch in ("sigma", "means", "weights"):
        for layer in (2, 3):
            packed.append(wt(f"{branch}_w{layer}"))
            packed.append(bt(f"{branch}_b{layer}"))
    return tuple(packed)


def gmm_hyper_y1_same_resolution(z1, params, *, M, K,
                                 matmul_dtype=jnp.bfloat16,
                                 out_dtype=None, tile_p=None):
    """z1: NCHW (B, 6M, H, W). Returns (sigma, means, weights), each (B, M*K, H, W).

    `params` is either the raw dict from init_params or the tuple returned by
    pack_gmm_params (preferred: pack once, reuse across calls).
    """
    B, C, H, W = z1.shape
    assert C == 6 * M, f"expected {6 * M} input channels, got {C}"
    MK = M * K
    HW = H * W

    if isinstance(params, dict):
        params = pack_gmm_params(params, M=M, K=K, matmul_dtype=matmul_dtype)
    out_dtype = z1.dtype if out_dtype is None else out_dtype

    # Metadata-only reshape, no dtype cast (avoids an extra HBM pass over z1).
    # Channels stay on the sublane axis, pixels go to the lanes.
    x = z1.reshape(B, C, HW)

    in_b = jnp.dtype(z1.dtype).itemsize
    out_b = jnp.dtype(out_dtype).itemsize
    # Per-pixel VMEM residency: double-buffered input/output blocks + f32
    # intermediates (h1 + live branch temps, rough upper bound).
    per_px = (2 * 6 * M * in_b + 2 * 3 * MK * out_b + (30 * M + 3 * MK) * 4)
    if tile_p is None:
        tile_p = _choose_tile_p(HW, B, per_px)
    n_pt = pl.cdiv(HW, tile_p)

    def pix_spec(rows):
        return pl.BlockSpec((None, rows, tile_p), lambda b, p: (b, 0, p))

    def full_spec(arr):
        return pl.BlockSpec(arr.shape, lambda b, p: (0, 0))

    in_specs = [pix_spec(C)] + [full_spec(p) for p in params]
    out_specs = tuple(pix_spec(MK) for _ in range(3))
    out_shape = tuple(
        jax.ShapeDtypeStruct((B, MK, HW), out_dtype) for _ in range(3)
    )

    # Scoped-VMEM budget: enough for the chosen tile + weights, capped well
    # below v7x's 64 MiB physical VMEM (v5e's default scoped limit is 16 MiB).
    wbytes = sum(int(p.size) * jnp.dtype(p.dtype).itemsize for p in params)
    est = per_px * tile_p + 2 * wbytes
    vmem_limit = int(min(max(est + 8 * 2**20, 32 * 2**20), 48 * 2**20))

    kernel = functools.partial(_gmm_kernel, M, K)

    sigma, means, weights = pl.pallas_call(
        kernel,
        grid=(B, n_pt),
        in_specs=in_specs,
        out_specs=out_specs,
        out_shape=out_shape,
        compiler_params=pltpu.CompilerParams(
            dimension_semantics=("parallel", "parallel"),
            vmem_limit_bytes=vmem_limit),
    )(x, *params)

    shape4 = (B, MK, H, W)
    return sigma.reshape(shape4), means.reshape(shape4), weights.reshape(shape4)


# ----------------------------- parameter init --------------------------------
def init_params(key, M, K):
    """Deterministic synthetic parameters.

    Every 1x1 (de)conv layer is stored as a linear map W: (C_in, C_out),
    b: (1, C_out) (applied as x @ W + b over pixel rows in the reference).
    Real PyTorch Conv2d/ConvTranspose2d (k=1, s=1) weights must be squeezed /
    transposed into this format.
    """
    # TODO(synk): the repo's deconv()/conv() factories are assumed to be plain
    # ConvTranspose2d/Conv2d with kernel_size=1, stride=1 (pointwise linear).
    MK = M * K
    dims = {
        "sigma":   [(6 * M, 6 * M), (6 * M, 4 * M), (4 * M, MK)],
        "means":   [(6 * M, 6 * M), (6 * M, 4 * M), (4 * M, MK)],
        "weights": [(6 * M, 6 * M), (6 * M, MK),    (MK, MK)],
    }
    params = {}
    for branch, layer_dims in dims.items():
        for idx, (cin, cout) in enumerate(layer_dims, start=1):
            key, kw, kb = jax.random.split(key, 3)
            scale = 1.0 / jnp.sqrt(jnp.float32(cin))
            params[f"{branch}_w{idx}"] = (
                jax.random.normal(kw, (cin, cout), jnp.float32) * scale
            )
            params[f"{branch}_b{idx}"] = (
                jax.random.uniform(kb, (1, cout), jnp.float32, -0.1, 0.1)
            )
    return params


# ----------------------------- pure-JAX reference ----------------------------
def _reference(z1, params, M, K):
    B, C, H, W = z1.shape
    MK = M * K
    x = jnp.transpose(z1, (0, 2, 3, 1)).reshape(-1, C).astype(jnp.float32)

    def lin(h, b, l):
        return h @ params[f"{b}_w{l}"] + params[f"{b}_b{l}"]

    s = jnp.maximum(lin(x, "sigma", 1), 0.0)
    s = jnp.maximum(lin(s, "sigma", 2), 0.0)
    s = jnp.maximum(lin(s, "sigma", 3), 0.0)

    m = _leaky_relu(lin(x, "means", 1))
    m = _leaky_relu(lin(m, "means", 2))
    m = lin(m, "means", 3)

    w = _leaky_relu(lin(x, "weights", 1))
    w = _leaky_relu(lin(w, "weights", 2))
    w = lin(w, "weights", 3)
    w = w.reshape(-1, K, M)
    w = jax.nn.softmax(w, axis=1)
    w = w.reshape(-1, MK)

    def back(y):
        return jnp.transpose(y.reshape(B, H, W, MK), (0, 3, 1, 2))

    return back(s), back(m), back(w)


if __name__ == "__main__":
    M, K = 4, 3
    B, H, W = 2, 16, 16

    key = jax.random.PRNGKey(0)
    key, kz = jax.random.split(key)
    params = init_params(key, M, K)
    z1 = jax.random.normal(kz, (B, 6 * M, H, W), jnp.float32)  # NCHW, like PyTorch

    rs, rm, rw = _reference(z1, params, M, K)

    # ---- exact-precision path (f32 MXU operands): tight tolerance -----------
    s32, m32, w32 = gmm_hyper_y1_same_resolution(
        z1, params, M=M, K=K, matmul_dtype=jnp.float32)
    jax.block_until_ready((s32, m32, w32))
    assert s32.shape == (B, M * K, H, W)
    assert m32.shape == (B, M * K, H, W)
    assert w32.shape == (B, M * K, H, W)
    assert jnp.allclose(s32, rs, atol=1e-3, rtol=1e-3)
    assert jnp.allclose(m32, rm, atol=1e-3, rtol=1e-3)
    assert jnp.allclose(w32, rw, atol=1e-3, rtol=1e-3)

    # ---- performance path: pre-packed bf16 MXU operands, f32 accumulation ---
    packed_bf16 = pack_gmm_params(params, M=M, K=K, matmul_dtype=jnp.bfloat16)
    sbf, mbf, wbf = gmm_hyper_y1_same_resolution(z1, packed_bf16, M=M, K=K)
    jax.block_until_ready((sbf, mbf, wbf))
    # bf16 operands => ~2^-8 relative error per matmul; validate at a looser bar.
    assert jnp.allclose(sbf, rs, atol=5e-2, rtol=5e-2)
    assert jnp.allclose(mbf, rm, atol=5e-2, rtol=5e-2)
    assert jnp.allclose(wbf, rw, atol=5e-2, rtol=5e-2)

    print("KERNEL_OK")
</pallas_src>

<mosaic_0001>
module attributes {stable_mosaic.version = 11 : i64} {
  func.func @_gmm_kernel(%arg0: i32, %arg1: i32, %arg2: memref<1x24x256xf32, #tpu.memory_space<vmem>>, %arg3: memref<72x24xf32, #tpu.memory_space<vmem>>, %arg4: memref<72x1xf32, #tpu.memory_space<vmem>>, %arg5: memref<16x24xf32, #tpu.memory_space<vmem>>, %arg6: memref<16x1xf32, #tpu.memory_space<vmem>>, %arg7: memref<12x16xf32, #tpu.memory_space<vmem>>, %arg8: memref<12x1xf32, #tpu.memory_space<vmem>>, %arg9: memref<16x24xf32, #tpu.memory_space<vmem>>, %arg10: memref<16x1xf32, #tpu.memory_space<vmem>>, %arg11: memref<12x16xf32, #tpu.memory_space<vmem>>, %arg12: memref<12x1xf32, #tpu.memory_space<vmem>>, %arg13: memref<12x24xf32, #tpu.memory_space<vmem>>, %arg14: memref<12x1xf32, #tpu.memory_space<vmem>>, %arg15: memref<12x12xf32, #tpu.memory_space<vmem>>, %arg16: memref<12x1xf32, #tpu.memory_space<vmem>>, %arg17: memref<1x12x256xf32, #tpu.memory_space<vmem>>, %arg18: memref<1x12x256xf32, #tpu.memory_space<vmem>>, %arg19: memref<1x12x256xf32, #tpu.memory_space<vmem>>) attributes {dimension_semantics = [#tpu.dimension_semantics<parallel>, #tpu.dimension_semantics<parallel>], iteration_bounds = array<i64: 2, 1>, scalar_prefetch = 0 : i64, scratch_operands = 0 : i64, tpu.core_type = #tpu.core_type<tc>, window_params = [{transform_indices = @transform_0, window_bounds = array<i64: 1, 24, 256>}, {pipeline_mode = #tpu.pipeline_mode<synchronous>, transform_indices = @transform_1, window_bounds = array<i64: 72, 24>}, {pipeline_mode = #tpu.pipeline_mode<synchronous>, transform_indices = @transform_2, window_bounds = array<i64: 72, 1>}, {pipeline_mode = #tpu.pipeline_mode<synchronous>, transform_indices = @transform_3, window_bounds = array<i64: 16, 24>}, {pipeline_mode = #tpu.pipeline_mode<synchronous>, transform_indices = @transform_4, window_bounds = array<i64: 16, 1>}, {pipeline_mode = #tpu.pipeline_mode<synchronous>, transform_indices = @transform_5, window_bounds = array<i64: 12, 16>}, {pipeline_mode = #tpu.pipeline_mode<synchronous>, transform_indices = @transform_6, window_bounds = array<i64: 12, 1>}, {pipeline_mode = #tpu.pipeline_mode<synchronous>, transform_indices = @transform_7, window_bounds = array<i64: 16, 24>}, {pipeline_mode = #tpu.pipeline_mode<synchronous>, transform_indices = @transform_8, window_bounds = array<i64: 16, 1>}, {pipeline_mode = #tpu.pipeline_mode<synchronous>, transform_indices = @transform_9, window_bounds = array<i64: 12, 16>}, {pipeline_mode = #tpu.pipeline_mode<synchronous>, transform_indices = @transform_10, window_bounds = array<i64: 12, 1>}, {pipeline_mode = #tpu.pipeline_mode<synchronous>, transform_indices = @transform_11, window_bounds = array<i64: 12, 24>}, {pipeline_mode = #tpu.pipeline_mode<synchronous>, transform_indices = @transform_12, window_bounds = array<i64: 12, 1>}, {pipeline_mode = #tpu.pipeline_mode<synchronous>, transform_indices = @transform_13, window_bounds = array<i64: 12, 12>}, {pipeline_mode = #tpu.pipeline_mode<synchronous>, transform_indices = @transform_14, window_bounds = array<i64: 12, 1>}, {transform_indices = @transform_15, window_bounds = array<i64: 1, 12, 256>}, {transform_indices = @transform_16, window_bounds = array<i64: 1, 12, 256>}, {transform_indices = @transform_17, window_bounds = array<i64: 1, 12, 256>}]} {
    %c0 = arith.constant 0 : index
    %c0_0 = arith.constant 0 : index
    %c0_1 = arith.constant 0 : index
    %0 = vector.load %arg2[%c0, %c0_0, %c0_1] : memref<1x24x256xf32, #tpu.memory_space<vmem>>, vector<1x24x256xf32>
    %1 = vector.shape_cast %0 : vector<1x24x256xf32> to vector<24x256xf32>
    %c0_2 = arith.constant 0 : index
    %c0_3 = arith.constant 0 : index
    %2 = vector.load %arg3[%c0_2, %c0_3] : memref<72x24xf32, #tpu.memory_space<vmem>>, vector<72x24xf32>
    %cst = arith.constant dense<0.000000e+00> : vector<72x256xf32>
    %3 = tpu.matmul %2, %1, %cst {dimension_numbers = #tpu.dot_dimension_numbers<[1], [0], [0], [1], [0, 0, 1, 1], [], []>} : vector<72x24xf32>, vector<24x256xf32>, vector<72x256xf32> -> vector<72x256xf32>
    %c0_4 = arith.constant 0 : index
    %c0_5 = arith.constant 0 : index
    %4 = vector.load %arg4[%c0_4, %c0_5] : memref<72x1xf32, #tpu.memory_space<vmem>>, vector<72x1xf32>
    %5 = vector.broadcast %4 : vector<72x1xf32> to vector<72x256xf32>
    %6 = arith.addf %3, %5 : vector<72x256xf32>
    %7 = vector.extract_strided_slice %6 {offsets = [0, 0], sizes = [24, 256], strides = [1, 1]} : vector<72x256xf32> to vector<24x256xf32>
    %cst_6 = arith.constant 0.000000e+00 : f32
    %8 = vector.broadcast %cst_6 : f32 to vector<24x256xf32>
    %9 = arith.maximumf %7, %8 : vector<24x256xf32>
    %10 = vector.extract_strided_slice %6 {offsets = [24, 0], sizes = [24, 256], strides = [1, 1]} : vector<72x256xf32> to vector<24x256xf32>
    %cst_7 = arith.constant 0.000000e+00 : f32
    %11 = vector.broadcast %cst_7 : f32 to vector<24x256xf32>
    %12 = arith.cmpf oge, %10, %11 : vector<24x256xf32>
    %cst_8 = arith.constant 0.00999999977 : f32
    %13 = vector.broadcast %cst_8 : f32 to vector<24x256xf32>
    %14 = arith.mulf %13, %10 : vector<24x256xf32>
    %15 = arith.select %12, %10, %14 : vector<24x256xi1>, vector<24x256xf32>
    %16 = vector.extract_strided_slice %6 {offsets = [48, 0], sizes = [24, 256], strides = [1, 1]} : vector<72x256xf32> to vector<24x256xf32>
    %cst_9 = arith.constant 0.000000e+00 : f32
    %17 = vector.broadcast %cst_9 : f32 to vector<24x256xf32>
    %18 = arith.cmpf oge, %16, %17 : vector<24x256xf32>
    %cst_10 = arith.constant 0.00999999977 : f32
    %19 = vector.broadcast %cst_10 : f32 to vector<24x256xf32>
    %20 = arith.mulf %19, %16 : vector<24x256xf32>
    %21 = arith.select %18, %16, %20 : vector<24x256xi1>, vector<24x256xf32>
    %c0_11 = arith.constant 0 : index
    %c0_12 = arith.constant 0 : index
    %22 = vector.load %arg5[%c0_11, %c0_12] : memref<16x24xf32, #tpu.memory_space<vmem>>, vector<16x24xf32>
    %cst_13 = arith.constant dense<0.000000e+00> : vector<16x256xf32>
    %23 = tpu.matmul %22, %9, %cst_13 {dimension_numbers = #tpu.dot_dimension_numbers<[1], [0], [0], [1], [0, 0, 1, 1], [], []>} : vector<16x24xf32>, vector<24x256xf32>, vector<16x256xf32> -> vector<16x256xf32>
    %c0_14 = arith.constant 0 : index
    %c0_15 = arith.constant 0 : index
    %24 = vector.load %arg6[%c0_14, %c0_15] : memref<16x1xf32, #tpu.memory_space<vmem>>, vector<16x1xf32>
    %25 = vector.broadcast %24 : vector<16x1xf32> to vector<16x256xf32>
    %26 = arith.addf %23, %25 : vector<16x256xf32>
    %cst_16 = arith.constant 0.000000e+00 : f32
    %27 = vector.broadcast %cst_16 : f32 to vector<16x256xf32>
    %28 = arith.maximumf %26, %27 : vector<16x256xf32>
    %c0_17 = arith.constant 0 : index
    %c0_18 = arith.constant 0 : index
    %29 = vector.load %arg7[%c0_17, %c0_18] : memref<12x16xf32, #tpu.memory_space<vmem>>, vector<12x16xf32>
    %cst_19 = arith.constant dense<0.000000e+00> : vector<12x256xf32>
    %30 = tpu.matmul %29, %28, %cst_19 {dimension_numbers = #tpu.dot_dimension_numbers<[1], [0], [0], [1], [0, 0, 1, 1], [], []>} : vector<12x16xf32>, vector<16x256xf32>, vector<12x256xf32> -> vector<12x256xf32>
    %c0_20 = arith.constant 0 : index
    %c0_21 = arith.constant 0 : index
    %31 = vector.load %arg8[%c0_20, %c0_21] : memref<12x1xf32, #tpu.memory_space<vmem>>, vector<12x1xf32>
    %32 = vector.broadcast %31 : vector<12x1xf32> to vector<12x256xf32>
    %33 = arith.addf %30, %32 : vector<12x256xf32>
    %cst_22 = arith.constant 0.000000e+00 : f32
    %34 = vector.broadcast %cst_22 : f32 to vector<12x256xf32>
    %35 = arith.maximumf %33, %34 : vector<12x256xf32>
    %c0_23 = arith.constant 0 : index
    %c0_24 = arith.constant 0 : index
    %c0_25 = arith.constant 0 : index
    %36 = vector.load %arg17[%c0_23, %c0_24, %c0_25] : memref<1x12x256xf32, #tpu.memory_space<vmem>>, vector<1x12x256xf32>
    %37 = vector.shape_cast %36 : vector<1x12x256xf32> to vector<12x256xf32>
    %38 = vector.shape_cast %35 : vector<12x256xf32> to vector<1x12x256xf32>
    tpu.vector_store %arg17[%c0_23, %c0_24, %c0_25], %38 {strides = array<i32>} : memref<1x12x256xf32, #tpu.memory_space<vmem>>, vector<1x12x256xf32>,
    %c0_26 = arith.constant 0 : index
    %c0_27 = arith.constant 0 : index
    %39 = vector.load %arg9[%c0_26, %c0_27] : memref<16x24xf32, #tpu.memory_space<vmem>>, vector<16x24xf32>
    %cst_28 = arith.constant dense<0.000000e+00> : vector<16x256xf32>
    %40 = tpu.matmul %39, %15, %cst_28 {dimension_numbers = #tpu.dot_dimension_numbers<[1], [0], [0], [1], [0, 0, 1, 1], [], []>} : vector<16x24xf32>, vector<24x256xf32>, vector<16x256xf32> -> vector<16x256xf32>
    %c0_29 = arith.constant 0 : index
    %c0_30 = arith.constant 0 : index
    %41 = vector.load %arg10[%c0_29, %c0_30] : memref<16x1xf32, #tpu.memory_space<vmem>>, vector<16x1xf32>
    %42 = vector.broadcast %41 : vector<16x1xf32> to vector<16x256xf32>
    %43 = arith.addf %40, %42 : vector<16x256xf32>
    %cst_31 = arith.constant 0.000000e+00 : f32
    %44 = vector.broadcast %cst_31 : f32 to vector<16x256xf32>
    %45 = arith.cmpf oge, %43, %44 : vector<16x256xf32>
    %cst_32 = arith.constant 0.00999999977 : f32
    %46 = vector.broadcast %cst_32 : f32 to vector<16x256xf32>
    %47 = arith.mulf %46, %43 : vector<16x256xf32>
    %48 = arith.select %45, %43, %47 : vector<16x256xi1>, vector<16x256xf32>
    %c0_33 = arith.constant 0 : index
    %c0_34 = arith.constant 0 : index
    %49 = vector.load %arg11[%c0_33, %c0_34] : memref<12x16xf32, #tpu.memory_space<vmem>>, vector<12x16xf32>
    %cst_35 = arith.constant dense<0.000000e+00> : vector<12x256xf32>
    %50 = tpu.matmul %49, %48, %cst_35 {dimension_numbers = #tpu.dot_dimension_numbers<[1], [0], [0], [1], [0, 0, 1, 1], [], []>} : vector<12x16xf32>, vector<16x256xf32>, vector<12x256xf32> -> vector<12x256xf32>
    %c0_36 = arith.constant 0 : index
    %c0_37 = arith.constant 0 : index
    %51 = vector.load %arg12[%c0_36, %c0_37] : memref<12x1xf32, #tpu.memory_space<vmem>>, vector<12x1xf32>
    %52 = vector.broadcast %51 : vector<12x1xf32> to vector<12x256xf32>
    %53 = arith.addf %50, %52 : vector<12x256xf32>
    %c0_38 = arith.constant 0 : index
    %c0_39 = arith.constant 0 : index
    %c0_40 = arith.constant 0 : index
    %54 = vector.load %arg18[%c0_38, %c0_39, %c0_40] : memref<1x12x256xf32, #tpu.memory_space<vmem>>, vector<1x12x256xf32>
    %55 = vector.shape_cast %54 : vector<1x12x256xf32> to vector<12x256xf32>
    %56 = vector.shape_cast %53 : vector<12x256xf32> to vector<1x12x256xf32>
    tpu.vector_store %arg18[%c0_38, %c0_39, %c0_40], %56 {strides = array<i32>} : memref<1x12x256xf32, #tpu.memory_space<vmem>>, vector<1x12x256xf32>,
    %c0_41 = arith.constant 0 : index
    %c0_42 = arith.constant 0 : index
    %57 = vector.load %arg13[%c0_41, %c0_42] : memref<12x24xf32, #tpu.memory_space<vmem>>, vector<12x24xf32>
    %cst_43 = arith.constant dense<0.000000e+00> : vector<12x256xf32>
    %58 = tpu.matmul %57, %21, %cst_43 {dimension_numbers = #tpu.dot_dimension_numbers<[1], [0], [0], [1], [0, 0, 1, 1], [], []>} : vector<12x24xf32>, vector<24x256xf32>, vector<12x256xf32> -> vector<12x256xf32>
    %c0_44 = arith.constant 0 : index
    %c0_45 = arith.constant 0 : index
    %59 = vector.load %arg14[%c0_44, %c0_45] : memref<12x1xf32, #tpu.memory_space<vmem>>, vector<12x1xf32>
    %60 = vector.broadcast %59 : vector<12x1xf32> to vector<12x256xf32>
    %61 = arith.addf %58, %60 : vector<12x256xf32>
    %cst_46 = arith.constant 0.000000e+00 : f32
    %62 = vector.broadcast %cst_46 : f32 to vector<12x256xf32>
    %63 = arith.cmpf oge, %61, %62 : vector<12x256xf32>
    %cst_47 = arith.constant 0.00999999977 : f32
    %64 = vector.broadcast %cst_47 : f32 to vector<12x256xf32>
    %65 = arith.mulf %64, %61 : vector<12x256xf32>
    %66 = arith.select %63, %61, %65 : vector<12x256xi1>, vector<12x256xf32>
    %c0_48 = arith.constant 0 : index
    %c0_49 = arith.constant 0 : index
    %67 = vector.load %arg15[%c0_48, %c0_49] : memref<12x12xf32, #tpu.memory_space<vmem>>, vector<12x12xf32>
    %cst_50 = arith.constant dense<0.000000e+00> : vector<12x256xf32>
    %68 = tpu.matmul %67, %66, %cst_50 {dimension_numbers = #tpu.dot_dimension_numbers<[1], [0], [0], [1], [0, 0, 1, 1], [], []>} : vector<12x12xf32>, vector<12x256xf32>, vector<12x256xf32> -> vector<12x256xf32>
    %c0_51 = arith.constant 0 : index
    %c0_52 = arith.constant 0 : index
    %69 = vector.load %arg16[%c0_51, %c0_52] : memref<12x1xf32, #tpu.memory_space<vmem>>, vector<12x1xf32>
    %70 = vector.broadcast %69 : vector<12x1xf32> to vector<12x256xf32>
    %71 = arith.addf %68, %70 : vector<12x256xf32>
    %72 = vector.extract_strided_slice %71 {offsets = [0, 0], sizes = [4, 256], strides = [1, 1]} : vector<12x256xf32> to vector<4x256xf32>
    %73 = vector.extract_strided_slice %71 {offsets = [4, 0], sizes = [4, 256], strides = [1, 1]} : vector<12x256xf32> to vector<4x256xf32>
    %74 = arith.maximumf %72, %73 : vector<4x256xf32>
    %75 = vector.extract_strided_slice %71 {offsets = [8, 0], sizes = [4, 256], strides = [1, 1]} : vector<12x256xf32> to vector<4x256xf32>
    %76 = arith.maximumf %74, %75 : vector<4x256xf32>
    %77 = tpu.concatenate %76, %76, %76 in 0 : vector<4x256xf32>, vector<4x256xf32>, vector<4x256xf32> -> vector<12x256xf32>
    %78 = arith.subf %71, %77 : vector<12x256xf32>
    %79 = math.exp %78 : vector<12x256xf32>
    %80 = vector.extract_strided_slice %79 {offsets = [0, 0], sizes = [4, 256], strides = [1, 1]} : vector<12x256xf32> to vector<4x256xf32>
    %81 = vector.extract_strided_slice %79 {offsets = [4, 0], sizes = [4, 256], strides = [1, 1]} : vector<12x256xf32> to vector<4x256xf32>
    %82 = arith.addf %80, %81 : vector<4x256xf32>
    %83 = vector.extract_strided_slice %79 {offsets = [8, 0], sizes = [4, 256], strides = [1, 1]} : vector<12x256xf32> to vector<4x256xf32>
    %84 = arith.addf %82, %83 : vector<4x256xf32>
    %cst_53 = arith.constant 1.000000e+00 : f32
    %85 = vector.broadcast %cst_53 : f32 to vector<4x256xf32>
    %86 = arith.divf %85, %84 : vector<4x256xf32>
    %87 = tpu.concatenate %86, %86, %86 in 0 : vector<4x256xf32>, vector<4x256xf32>, vector<4x256xf32> -> vector<12x256xf32>
    %88 = arith.mulf %79, %87 : vector<12x256xf32>
    %c0_54 = arith.constant 0 : index
    %c0_55 = arith.constant 0 : index
    %c0_56 = arith.constant 0 : index
    %89 = vector.load %arg19[%c0_54, %c0_55, %c0_56] : memref<1x12x256xf32, #tpu.memory_space<vmem>>, vector<1x12x256xf32>
    %90 = vector.shape_cast %89 : vector<1x12x256xf32> to vector<12x256xf32>
    %91 = vector.shape_cast %88 : vector<12x256xf32> to vector<1x12x256xf32>
    tpu.vector_store %arg19[%c0_54, %c0_55, %c0_56], %91 {strides = array<i32>} : memref<1x12x256xf32, #tpu.memory_space<vmem>>, vector<1x12x256xf32>,
    return
  }
  func.func @transform_0(%arg0: i32, %arg1: i32) -> (i32, i32, i32) {
    %c0_i32 = arith.constant 0 : i32
    %c0_i32_0 = arith.constant 0 : i32
    return %arg0, %c0_i32, %arg1 : i32, i32, i32
  }
  func.func @transform_1(%arg0: i32, %arg1: i32) -> (i32, i32) {
    %c0_i32 = arith.constant 0 : i32
    %c0_i32_0 = arith.constant 0 : i32
    %c0_i32_1 = arith.constant 0 : i32
    return %c0_i32, %c0_i32_0 : i32, i32
  }
  func.func @transform_2(%arg0: i32, %arg1: i32) -> (i32, i32) {
    %c0_i32 = arith.constant 0 : i32
    %c0_i32_0 = arith.constant 0 : i32
    %c0_i32_1 = arith.constant 0 : i32
    return %c0_i32, %c0_i32_0 : i32, i32
  }
  func.func @transform_3(%arg0: i32, %arg1: i32) -> (i32, i32) {
    %c0_i32 = arith.constant 0 : i32
    %c0_i32_0 = arith.constant 0 : i32
    %c0_i32_1 = arith.constant 0 : i32
    return %c0_i32, %c0_i32_0 : i32, i32
  }
  func.func @transform_4(%arg0: i32, %arg1: i32) -> (i32, i32) {
    %c0_i32 = arith.constant 0 : i32
    %c0_i32_0 = arith.constant 0 : i32
    %c0_i32_1 = arith.constant 0 : i32
    return %c0_i32, %c0_i32_0 : i32, i32
  }
  func.func @transform_5(%arg0: i32, %arg1: i32) -> (i32, i32) {
    %c0_i32 = arith.constant 0 : i32
    %c0_i32_0 = arith.constant 0 : i32
    %c0_i32_1 = arith.constant 0 : i32
    return %c0_i32, %c0_i32_0 : i32, i32
  }
  func.func @transform_6(%arg0: i32, %arg1: i32) -> (i32, i32) {
    %c0_i32 = arith.constant 0 : i32
    %c0_i32_0 = arith.constant 0 : i32
    %c0_i32_1 = arith.constant 0 : i32
    return %c0_i32, %c0_i32_0 : i32, i32
  }
  func.func @transform_7(%arg0: i32, %arg1: i32) -> (i32, i32) {
    %c0_i32 = arith.constant 0 : i32
    %c0_i32_0 = arith.constant 0 : i32
    %c0_i32_1 = arith.constant 0 : i32
    return %c0_i32, %c0_i32_0 : i32, i32
  }
  func.func @transform_8(%arg0: i32, %arg1: i32) -> (i32, i32) {
    %c0_i32 = arith.constant 0 : i32
    %c0_i32_0 = arith.constant 0 : i32
    %c0_i32_1 = arith.constant 0 : i32
    return %c0_i32, %c0_i32_0 : i32, i32
  }
  func.func @transform_9(%arg0: i32, %arg1: i32) -> (i32, i32) {
    %c0_i32 = arith.constant 0 : i32
    %c0_i32_0 = arith.constant 0 : i32
    %c0_i32_1 = arith.constant 0 : i32
    return %c0_i32, %c0_i32_0 : i32, i32
  }
  func.func @transform_10(%arg0: i32, %arg1: i32) -> (i32, i32) {
    %c0_i32 = arith.constant 0 : i32
    %c0_i32_0 = arith.constant 0 : i32
    %c0_i32_1 = arith.constant 0 : i32
    return %c0_i32, %c0_i32_0 : i32, i32
  }
  func.func @transform_11(%arg0: i32, %arg1: i32) -> (i32, i32) {
    %c0_i32 = arith.constant 0 : i32
    %c0_i32_0 = arith.constant 0 : i32
    %c0_i32_1 = arith.constant 0 : i32
    return %c0_i32, %c0_i32_0 : i32, i32
  }
  func.func @transform_12(%arg0: i32, %arg1: i32) -> (i32, i32) {
    %c0_i32 = arith.constant 0 : i32
    %c0_i32_0 = arith.constant 0 : i32
    %c0_i32_1 = arith.constant 0 : i32
    return %c0_i32, %c0_i32_0 : i32, i32
  }
  func.func @transform_13(%arg0: i32, %arg1: i32) -> (i32, i32) {
    %c0_i32 = arith.constant 0 : i32
    %c0_i32_0 = arith.constant 0 : i32
    %c0_i32_1 = arith.constant 0 : i32
    return %c0_i32, %c0_i32_0 : i32, i32
  }
  func.func @transform_14(%arg0: i32, %arg1: i32) -> (i32, i32) {
    %c0_i32 = arith.constant 0 : i32
    %c0_i32_0 = arith.constant 0 : i32
    %c0_i32_1 = arith.constant 0 : i32
    return %c0_i32, %c0_i32_0 : i32, i32
  }
  func.func @transform_15(%arg0: i32, %arg1: i32) -> (i32, i32, i32) {
    %c0_i32 = arith.constant 0 : i32
    %c0_i32_0 = arith.constant 0 : i32
    return %arg0, %c0_i32, %arg1 : i32, i32, i32
  }
  func.func @transform_16(%arg0: i32, %arg1: i32) -> (i32, i32, i32) {
    %c0_i32 = arith.constant 0 : i32
    %c0_i32_0 = arith.constant 0 : i32
    return %arg0, %c0_i32, %arg1 : i32, i32, i32
  }
  func.func @transform_17(%arg0: i32, %arg1: i32) -> (i32, i32, i32) {
    %c0_i32 = arith.constant 0 : i32
    %c0_i32_0 = arith.constant 0 : i32
    return %arg0, %c0_i32, %arg1 : i32, i32, i32
  }
}

</mosaic_0001>

<llo_original>
// kernel: tpu_custom_call.1
$region0: #{tpu_custom_call.1}
  #allocation0 [shape = 'u32[]', space=smem, size = 0x4, offset = 0x4, fixed_abs, tag = 'smem constant byte address 0x4 - core index']
  #allocation1 [shape = 'u32[144,128]{1,0:T(1,128)}', space=vmem, size = 0x12000, scoped, tag = 'internal scratch']
  %s0 = inlined_call_operand.vmem [shape: f32[2,24,256], index: 0, kind: input, shape index: {}]
  %s1 = inlined_call_operand.vmem [shape: f32[72,24], index: 1, kind: input, shape index: {}]
  %s2 = inlined_call_operand.vmem [shape: f32[72,1], index: 2, kind: input, shape index: {}]
  %s3 = inlined_call_operand.vmem [shape: f32[16,24], index: 3, kind: input, shape index: {}]
  %s4 = inlined_call_operand.vmem [shape: f32[16,1], index: 4, kind: input, shape index: {}]
  %s5 = inlined_call_operand.vmem [shape: f32[12,16], index: 5, kind: input, shape index: {}]
  %s6 = inlined_call_operand.vmem [shape: f32[12,1], index: 6, kind: input, shape index: {}]
  %s7 = inlined_call_operand.vmem [shape: f32[16,24], index: 7, kind: input, shape index: {}]
  %s8 = inlined_call_operand.vmem [shape: f32[16,1], index: 8, kind: input, shape index: {}]
  %s9 = inlined_call_operand.vmem [shape: f32[12,16], index: 9, kind: input, shape index: {}]
  %s10 = inlined_call_operand.vmem [shape: f32[12,1], index: 10, kind: input, shape index: {}]
  %s11 = inlined_call_operand.vmem [shape: f32[12,24], index: 11, kind: input, shape index: {}]
  %s12 = inlined_call_operand.vmem [shape: f32[12,1], index: 12, kind: input, shape index: {}]
  %s13 = inlined_call_operand.vmem [shape: f32[12,12], index: 13, kind: input, shape index: {}]
  %s14 = inlined_call_operand.vmem [shape: f32[12,1], index: 14, kind: input, shape index: {}]
  %s15 = inlined_call_operand.vmem [shape: f32[2,12,256], index: 15, kind: output, shape index: {0}]
  %s16 = inlined_call_operand.vmem [shape: f32[2,12,256], index: 16, kind: output, shape index: {1}]
  %s17 = inlined_call_operand.vmem [shape: f32[2,12,256], index: 17, kind: output, shape index: {2}]
  %18 = xla_tuple %s15, %s16, %s17
  %s19 = sld [smem:[#allocation0]]
  $region109: #{tpu_custom_call.1} parent=0
    _
  %s21 = ssub.s32 1, %s19
  %s22 = scalar_select 0, %s21, %s19
  loop: start=0, step=1, limit=4
  $region2: #{tpu_custom_call.1} parent=0 // loop_pre_header
    _
  $region3: #{tpu_custom_call.1} parent=0 // loop_header
    %s24 = sphi 0, %s28
    %p25 = scmp.ge.s32.totalorder %s24, 4
    %s31 = sphi 0, %s43
    %s32 = sphi 0, %s39
    %s33 = sphi 0, %s31
    %s34 = sphi 0, %s32
    %s35 = sphi 0, %s33
    %s36 = sphi 0, %s34
    %s48 = sphi 0, %s50
    %s51 = sphi 0, %s48
    %s52 = sphi 0, %s51
    %s68 = sphi 0, %s52
    %s72 = sphi 0, %s72
    %s74 = sphi 0, %s72
    %s75 = sphi 0, %s74
    %s89 = sphi 0, %s75
    %s93 = sphi 0, %s93
    %s95 = sphi 0, %s93
    %s96 = sphi 0, %s95
    %s110 = sphi 0, %s96
    %s114 = sphi 0, %s114
    %s116 = sphi 0, %s114
    %s117 = sphi 0, %s116
    %s131 = sphi 0, %s117
    %s135 = sphi 0, %s135
    %s137 = sphi 0, %s135
    %s138 = sphi 0, %s137
    %s152 = sphi 0, %s138
    %s156 = sphi 0, %s156
    %s158 = sphi 0, %s156
    %s159 = sphi 0, %s158
    %s173 = sphi 0, %s159
    %s177 = sphi 0, %s177
    %s179 = sphi 0, %s177
    %s180 = sphi 0, %s179
    %s194 = sphi 0, %s180
    %s198 = sphi 0, %s198
    %s200 = sphi 0, %s198
    %s201 = sphi 0, %s200
    %s215 = sphi 0, %s201
    %s219 = sphi 0, %s219
    %s221 = sphi 0, %s219
    %s222 = sphi 0, %s221
    %s236 = sphi 0, %s222
    %s240 = sphi 0, %s240
    %s242 = sphi 0, %s240
    %s243 = sphi 0, %s242
    %s257 = sphi 0, %s243
    %s261 = sphi 0, %s261
    %s263 = sphi 0, %s261
    %s264 = sphi 0, %s263
    %s278 = sphi 0, %s264
    %s282 = sphi 0, %s282
    %s284 = sphi 0, %s282
    %s285 = sphi 0, %s284
    %s299 = sphi 0, %s285
    %s303 = sphi 0, %s303
    %s305 = sphi 0, %s303
    %s306 = sphi 0, %s305
    %s320 = sphi 0, %s306
    %s324 = sphi 0, %s324
    %s326 = sphi 0, %s324
    %s327 = sphi 0, %s326
    %s341 = sphi 0, %s327
    %s345 = sphi 0, %s345
    %s347 = sphi 0, %s345
    %s348 = sphi 0, %s347
    %s362 = sphi 0, %s348
    %s370 = sphi 0, %s372
    %s373 = sphi 0, %s370
    %s374 = sphi 0, %s373
    %s390 = sphi 0, %s374
    %s398 = sphi 0, %s400
    %s401 = sphi 0, %s398
    %s402 = sphi 0, %s401
    %s418 = sphi 0, %s402
    %s426 = sphi 0, %s428
    %s429 = sphi 0, %s426
    %s430 = sphi 0, %s429
    %s446 = sphi 0, %s430
  $region4: #{tpu_custom_call.1} parent=0 // loop_header_branch
    %27 = sbr.rel (%p25) target = $region8
  $region5: #{tpu_custom_call.1} parent=0 // loop_body
    %s29 = ssub.s32 %s24, 1
    %s30 = ssub.s32 %s24, 2
    %s37 = sadd.s32 1, %s32
    %p38 = scmp.ge.s32.totalorder %s37, 1
    %s39 = scalar_select %p38, 0, %s37
    %s40 = sadd.s32 1, %s31
    %s41 = scalar_select %p38, %s40, %s31
    %p42 = scmp.ge.s32.totalorder %s41, 2
    %s43 = scalar_select %p42, 0, %s41
    %s44 = ssub.s32 %s31, %s43
    %s45 = ssub.s32 %s32, %s39
    %s46 = sor.u32 %s44, %s45
    %p47 = scmp.eq.s32.totalorder %s46, 0
    %s49 = sadd.s32 %s48, 1
    %s50 = scalar_select %p47, %s48, %s49
    %p53 = pneg %p47
    %p54 = scmp.eq.s32.totalorder %s24, 1
    %p55 = por %p53, %p54
    %p56 = scmp.ne.s32.totalorder %s48, %s51
    %p57 = scmp.eq.s32.totalorder %s24, 0
    %p58 = por %p56, %p57
    %p59 = scmp.ne.s32.totalorder %s48, %s51
    %p60 = scmp.eq.s32.totalorder %s29, 1
    %p61 = por %p59, %p60
    %p62 = scmp.ne.s32.totalorder %s51, %s52
    %p63 = scmp.eq.s32.totalorder %s29, 0
    %p64 = por %p62, %p63
    %p65 = scmp.ne.s32.totalorder %s51, %s52
    %p66 = scmp.eq.s32.totalorder %s30, 1
    %p67 = por %p65, %p66
    %p69 = scmp.ne.s32.totalorder %s52, %s68
    %p70 = scmp.eq.s32.totalorder %s30, 0
    %p71 = por %p69, %p70
    %s73 = sadd.s32 %s72, 1
    %p76 = scmp.eq.s32.totalorder %s24, 1
    %p77 = scmp.ne.s32.totalorder %s72, %s74
    %p78 = scmp.eq.s32.totalorder %s24, 0
    %p79 = por %p77, %p78
    %p80 = scmp.ne.s32.totalorder %s72, %s74
    %p81 = scmp.eq.s32.totalorder %s29, 1
    %p82 = por %p80, %p81
    %p83 = scmp.ne.s32.totalorder %s74, %s75
    %p84 = scmp.eq.s32.totalorder %s29, 0
    %p85 = por %p83, %p84
    %p86 = scmp.ne.s32.totalorder %s74, %s75
    %p87 = scmp.eq.s32.totalorder %s30, 1
    %p88 = por %p86, %p87
    %p90 = scmp.ne.s32.totalorder %s75, %s89
    %p91 = scmp.eq.s32.totalorder %s30, 0
    %p92 = por %p90, %p91
    %s94 = sadd.s32 %s93, 1
    %p97 = scmp.eq.s32.totalorder %s24, 1
    %p98 = scmp.ne.s32.totalorder %s93, %s95
    %p99 = scmp.eq.s32.totalorder %s24, 0
    %p100 = por %p98, %p99
    %p101 = scmp.ne.s32.totalorder %s93, %s95
    %p102 = scmp.eq.s32.totalorder %s29, 1
    %p103 = por %p101, %p102
    %p104 = scmp.ne.s32.totalorder %s95, %s96
    %p105 = scmp.eq.s32.totalorder %s29, 0
    %p106 = por %p104, %p105
    %p107 = scmp.ne.s32.totalorder %s95, %s96
    %p108 = scmp.eq.s32.totalorder %s30, 1
    %p109 = por %p107, %p108
    %p111 = scmp.ne.s32.totalorder %s96, %s110
    %p112 = scmp.eq.s32.totalorder %s30, 0
    %p113 = por %p111, %p112
    %s115 = sadd.s32 %s114, 1
    %p118 = scmp.eq.s32.totalorder %s24, 1
    %p119 = scmp.ne.s32.totalorder %s114, %s116
    %p120 = scmp.eq.s32.totalorder %s24, 0
    %p121 = por %p119, %p120
    %p122 = scmp.ne.s32.totalorder %s114, %s116
    %p123 = scmp.eq.s32.totalorder %s29, 1
    %p124 = por %p122, %p123
    %p125 = scmp.ne.s32.totalorder %s116, %s117
    %p126 = scmp.eq.s32.totalorder %s29, 0
    %p127 = por %p125, %p126
    %p128 = scmp.ne.s32.totalorder %s116, %s117
    %p129 = scmp.eq.s32.totalorder %s30, 1
    %p130 = por %p128, %p129
    %p132 = scmp.ne.s32.totalorder %s117, %s131
    %p133 = scmp.eq.s32.totalorder %s30, 0
    %p134 = por %p132, %p133
    %s136 = sadd.s32 %s135, 1
    %p139 = scmp.eq.s32.totalorder %s24, 1
    %p140 = scmp.ne.s32.totalorder %s135, %s137
    %p141 = scmp.eq.s32.totalorder %s24, 0
    %p142 = por %p140, %p141
    %p143 = scmp.ne.s32.totalorder %s135, %s137
    %p144 = scmp.eq.s32.totalorder %s29, 1
    %p145 = por %p143, %p144
    %p146 = scmp.ne.s32.totalorder %s137, %s138
    %p147 = scmp.eq.s32.totalorder %s29, 0
    %p148 = por %p146, %p147
    %p149 = scmp.ne.s32.totalorder %s137, %s138
    %p150 = scmp.eq.s32.totalorder %s30, 1
    %p151 = por %p149, %p150
    %p153 = scmp.ne.s32.totalorder %s138, %s152
    %p154 = scmp.eq.s32.totalorder %s30, 0
    %p155 = por %p153, %p154
    %s157 = sadd.s32 %s156, 1
    %p160 = scmp.eq.s32.totalorder %s24, 1
    %p161 = scmp.ne.s32.totalorder %s156, %s158
    %p162 = scmp.eq.s32.totalorder %s24, 0
    %p163 = por %p161, %p162
    %p164 = scmp.ne.s32.totalorder %s156, %s158
    %p165 = scmp.eq.s32.totalorder %s29, 1
    %p166 = por %p164, %p165
    %p167 = scmp.ne.s32.totalorder %s158, %s159
    %p168 = scmp.eq.s32.totalorder %s29, 0
    %p169 = por %p167, %p168
    %p170 = scmp.ne.s32.totalorder %s158, %s159
    %p171 = scmp.eq.s32.totalorder %s30, 1
    %p172 = por %p170, %p171
    %p174 = scmp.ne.s32.totalorder %s159, %s173
    %p175 = scmp.eq.s32.totalorder %s30, 0
    %p176 = por %p174, %p175
    %s178 = sadd.s32 %s177, 1
    %p181 = scmp.eq.s32.totalorder %s24, 1
    %p182 = scmp.ne.s32.totalorder %s177, %s179
    %p183 = scmp.eq.s32.totalorder %s24, 0
    %p184 = por %p182, %p183
    %p185 = scmp.ne.s32.totalorder %s177, %s179
    %p186 = scmp.eq.s32.totalorder %s29, 1
    %p187 = por %p185, %p186
    %p188 = scmp.ne.s32.totalorder %s179, %s180
    %p189 = scmp.eq.s32.totalorder %s29, 0
    %p190 = por %p188, %p189
    %p191 = scmp.ne.s32.totalorder %s179, %s180
    %p192 = scmp.eq.s32.totalorder %s30, 1
    %p193 = por %p191, %p192
    %p195 = scmp.ne.s32.totalorder %s180, %s194
    %p196 = scmp.eq.s32.totalorder %s30, 0
    %p197 = por %p195, %p196
    %s199 = sadd.s32 %s198, 1
    %p202 = scmp.eq.s32.totalorder %s24, 1
    %p203 = scmp.ne.s32.totalorder %s198, %s200
    %p204 = scmp.eq.s32.totalorder %s24, 0
    %p205 = por %p203, %p204
    %p206 = scmp.ne.s32.totalorder %s198, %s200
    %p207 = scmp.eq.s32.totalorder %s29, 1
    %p208 = por %p206, %p207
    %p209 = scmp.ne.s32.totalorder %s200, %s201
    %p210 = scmp.eq.s32.totalorder %s29, 0
    %p211 = por %p209, %p210
    %p212 = scmp.ne.s32.totalorder %s200, %s201
    %p213 = scmp.eq.s32.totalorder %s30, 1
    %p214 = por %p212, %p213
    %p216 = scmp.ne.s32.totalorder %s201, %s215
    %p217 = scmp.eq.s32.totalorder %s30, 0
    %p218 = por %p216, %p217
    %s220 = sadd.s32 %s219, 1
    %p223 = scmp.eq.s32.totalorder %s24, 1
    %p224 = scmp.ne.s32.totalorder %s219, %s221
    %p225 = scmp.eq.s32.totalorder %s24, 0
    %p226 = por %p224, %p225
    %p227 = scmp.ne.s32.totalorder %s219, %s221
    %p228 = scmp.eq.s32.totalorder %s29, 1
    %p229 = por %p227, %p228
    %p230 = scmp.ne.s32.totalorder %s221, %s222
    %p231 = scmp.eq.s32.totalorder %s29, 0
    %p232 = por %p230, %p231
    %p233 = scmp.ne.s32.totalorder %s221, %s222
    %p234 = scmp.eq.s32.totalorder %s30, 1
    %p235 = por %p233, %p234
    %p237 = scmp.ne.s32.totalorder %s222, %s236
    %p238 = scmp.eq.s32.totalorder %s30, 0
    %p239 = por %p237, %p238
    %s241 = sadd.s32 %s240, 1
    %p244 = scmp.eq.s32.totalorder %s24, 1
    %p245 = scmp.ne.s32.totalorder %s240, %s242
    %p246 = scmp.eq.s32.totalorder %s24, 0
    %p247 = por %p245, %p246
    %p248 = scmp.ne.s32.totalorder %s240, %s242
    %p249 = scmp.eq.s32.totalorder %s29, 1
    %p250 = por %p248, %p249
    %p251 = scmp.ne.s32.totalorder %s242, %s243
    %p252 = scmp.eq.s32.totalorder %s29, 0
    %p253 = por %p251, %p252
    %p254 = scmp.ne.s32.totalorder %s242, %s243
    %p255 = scmp.eq.s32.totalorder %s30, 1
    %p256 = por %p254, %p255
    %p258 = scmp.ne.s32.totalorder %s243, %s257
    %p259 = scmp.eq.s32.totalorder %s30, 0
    %p260 = por %p258, %p259
    %s262 = sadd.s32 %s261, 1
    %p265 = scmp.eq.s32.totalorder %s24, 1
    %p266 = scmp.ne.s32.totalorder %s261, %s263
    %p267 = scmp.eq.s32.totalorder %s24, 0
    %p268 = por %p266, %p267
    %p269 = scmp.ne.s32.totalorder %s261, %s263
    %p270 = scmp.eq.s32.totalorder %s29, 1
    %p271 = por %p269, %p270
    %p272 = scmp.ne.s32.totalorder %s263, %s264
    %p273 = scmp.eq.s32.totalorder %s29, 0
    %p274 = por %p272, %p273
    %p275 = scmp.ne.s32.totalorder %s263, %s264
    %p276 = scmp.eq.s32.totalorder %s30, 1
    %p277 = por %p275, %p276
    %p279 = scmp.ne.s32.totalorder %s264, %s278
    %p280 = scmp.eq.s32.totalorder %s30, 0
    %p281 = por %p279, %p280
    %s283 = sadd.s32 %s282, 1
    %p286 = scmp.eq.s32.totalorder %s24, 1
    %p287 = scmp.ne.s32.totalorder %s282, %s284
    %p288 = scmp.eq.s32.totalorder %s24, 0
    %p289 = por %p287, %p288
    %p290 = scmp.ne.s32.totalorder %s282, %s284
    %p291 = scmp.eq.s32.totalorder %s29, 1
    %p292 = por %p290, %p291
    %p293 = scmp.ne.s32.totalorder %s284, %s285
    %p294 = scmp.eq.s32.totalorder %s29, 0
    %p295 = por %p293, %p294
    %p296 = scmp.ne.s32.totalorder %s284, %s285
    %p297 = scmp.eq.s32.totalorder %s30, 1
    %p298 = por %p296, %p297
    %p300 = scmp.ne.s32.totalorder %s285, %s299
    %p301 = scmp.eq.s32.totalorder %s30, 0
    %p302 = por %p300, %p301
    %s304 = sadd.s32 %s303, 1
    %p307 = scmp.eq.s32.totalorder %s24, 1
    %p308 = scmp.ne.s32.totalorder %s303, %s305
    %p309 = scmp.eq.s32.totalorder %s24, 0
    %p310 = por %p308, %p309
    %p311 = scmp.ne.s32.totalorder %s303, %s305
    %p312 = scmp.eq.s32.totalorder %s29, 1
    %p313 = por %p311, %p312
    %p314 = scmp.ne.s32.totalorder %s305, %s306
    %p315 = scmp.eq.s32.totalorder %s29, 0
    %p316 = por %p314, %p315
    %p317 = scmp.ne.s32.totalorder %s305, %s306
    %p318 = scmp.eq.s32.totalorder %s30, 1
    %p319 = por %p317, %p318
    %p321 = scmp.ne.s32.totalorder %s306, %s320
    %p322 = scmp.eq.s32.totalorder %s30, 0
    %p323 = por %p321, %p322
    %s325 = sadd.s32 %s324, 1
    %p328 = scmp.eq.s32.totalorder %s24, 1
    %p329 = scmp.ne.s32.totalorder %s324, %s326
    %p330 = scmp.eq.s32.totalorder %s24, 0
    %p331 = por %p329, %p330
    %p332 = scmp.ne.s32.totalorder %s324, %s326
    %p333 = scmp.eq.s32.totalorder %s29, 1
    %p334 = por %p332, %p333
    %p335 = scmp.ne.s32.totalorder %s326, %s327
    %p336 = scmp.eq.s32.totalorder %s29, 0
    %p337 = por %p335, %p336
    %p338 = scmp.ne.s32.totalorder %s326, %s327
    %p339 = scmp.eq.s32.totalorder %s30, 1
    %p340 = por %p338, %p339
    %p342 = scmp.ne.s32.totalorder %s327, %s341
    %p343 = scmp.eq.s32.totalorder %s30, 0
    %p344 = por %p342, %p343
    %s346 = sadd.s32 %s345, 1
    %p349 = scmp.eq.s32.totalorder %s24, 1
    %p350 = scmp.ne.s32.totalorder %s345, %s347
    %p351 = scmp.eq.s32.totalorder %s24, 0
    %p352 = por %p350, %p351
    %p353 = scmp.ne.s32.totalorder %s345, %s347
    %p354 = scmp.eq.s32.totalorder %s29, 1
    %p355 = por %p353, %p354
    %p356 = scmp.ne.s32.totalorder %s347, %s348
    %p357 = scmp.eq.s32.totalorder %s29, 0
    %p358 = por %p356, %p357
    %p359 = scmp.ne.s32.totalorder %s347, %s348
    %p360 = scmp.eq.s32.totalorder %s30, 1
    %p361 = por %p359, %p360
    %p363 = scmp.ne.s32.totalorder %s348, %s362
    %p364 = scmp.eq.s32.totalorder %s30, 0
    %p365 = por %p363, %p364
    %s366 = ssub.s32 %s31, %s43
    %s367 = ssub.s32 %s32, %s39
    %s368 = sor.u32 %s366, %s367
    %p369 = scmp.eq.s32.totalorder %s368, 0
    %s371 = sadd.s32 %s370, 1
    %s372 = scalar_select %p369, %s370, %s371
    %p375 = pneg %p369
    %p376 = scmp.eq.s32.totalorder %s24, 1
    %p377 = por %p375, %p376
    %p378 = scmp.ne.s32.totalorder %s370, %s373
    %p379 = scmp.eq.s32.totalorder %s24, 0
    %p380 = por %p378, %p379
    %p381 = scmp.ne.s32.totalorder %s370, %s373
    %p382 = scmp.eq.s32.totalorder %s29, 1
    %p383 = por %p381, %p382
    %p384 = scmp.ne.s32.totalorder %s373, %s374
    %p385 = scmp.eq.s32.totalorder %s29, 0
    %p386 = por %p384, %p385
    %p387 = scmp.ne.s32.totalorder %s373, %s374
    %p388 = scmp.eq.s32.totalorder %s30, 1
    %p389 = por %p387, %p388
    %p391 = scmp.ne.s32.totalorder %s374, %s390
    %p392 = scmp.eq.s32.totalorder %s30, 0
    %p393 = por %p391, %p392
    %s394 = ssub.s32 %s31, %s43
    %s395 = ssub.s32 %s32, %s39
    %s396 = sor.u32 %s394, %s395
    %p397 = scmp.eq.s32.totalorder %s396, 0
    %s399 = sadd.s32 %s398, 1
    %s400 = scalar_select %p397, %s398, %s399
    %p403 = pneg %p397
    %p404 = scmp.eq.s32.totalorder %s24, 1
    %p405 = por %p403, %p404
    %p406 = scmp.ne.s32.totalorder %s398, %s401
    %p407 = scmp.eq.s32.totalorder %s24, 0
    %p408 = por %p406, %p407
    %p409 = scmp.ne.s32.totalorder %s398, %s401
    %p410 = scmp.eq.s32.totalorder %s29, 1
    %p411 = por %p409, %p410
    %p412 = scmp.ne.s32.totalorder %s401, %s402
    %p413 = scmp.eq.s32.totalorder %s29, 0
    %p414 = por %p412, %p413
    %p415 = scmp.ne.s32.totalorder %s401, %s402
    %p416 = scmp.eq.s32.totalorder %s30, 1
    %p417 = por %p415, %p416
    %p419 = scmp.ne.s32.totalorder %s402, %s418
    %p420 = scmp.eq.s32.totalorder %s30, 0
    %p421 = por %p419, %p420
    %s422 = ssub.s32 %s31, %s43
    %s423 = ssub.s32 %s32, %s39
    %s424 = sor.u32 %s422, %s423
    %p425 = scmp.eq.s32.totalorder %s424, 0
    %s427 = sadd.s32 %s426, 1
    %s428 = scalar_select %p425, %s426, %s427
    %p431 = pneg %p425
    %p432 = scmp.eq.s32.totalorder %s24, 1
    %p433 = por %p431, %p432
    %p434 = scmp.ne.s32.totalorder %s426, %s429
    %p435 = scmp.eq.s32.totalorder %s24, 0
    %p436 = por %p434, %p435
    %p437 = scmp.ne.s32.totalorder %s426, %s429
    %p438 = scmp.eq.s32.totalorder %s29, 1
    %p439 = por %p437, %p438
    %p440 = scmp.ne.s32.totalorder %s429, %s430
    %p441 = scmp.eq.s32.totalorder %s29, 0
    %p442 = por %p440, %p441
    %p443 = scmp.ne.s32.totalorder %s429, %s430
    %p444 = scmp.eq.s32.totalorder %s30, 1
    %p445 = por %p443, %p444
    %p447 = scmp.ne.s32.totalorder %s430, %s446
    %p448 = scmp.eq.s32.totalorder %s30, 0
    %p449 = por %p447, %p448
    %p450 = scmp.le.s32.totalorder 1, %s24
    %p451 = scmp.lt.s32.totalorder %s24, 3
    %p452 = pnand %p450, %p451
    %p453 = pneg %p452
    // Predicated region
    $region9: #{tpu_custom_call.1} parent=5 // pred_check
      _
    $region10: #{tpu_custom_call.1} parent=5 // pred_check_branch
      %455 = sbr.rel (%p452) target = $region12
    $region11: #{tpu_custom_call.1} parent=5 // pred_region
      %s456 = ssub.s32 %s24, 1
      // Predicated region
      $region13: #{tpu_custom_call.1} parent=11 // pred_check
        %p457 = pneg %p85
      $region14: #{tpu_custom_call.1} parent=11 // pred_check_branch
        %459 = sbr.rel (%p457) target = $region16
      $region15: #{tpu_custom_call.1} parent=11 // pred_region
        _
      $region16: #{tpu_custom_call.1} parent=11 // pred_fallthru
        _
      // Predicated region
      $region17: #{tpu_custom_call.1} parent=11 // pred_check
        %p460 = pneg %p106
      $region18: #{tpu_custom_call.1} parent=11 // pred_check_branch
        %462 = sbr.rel (%p460) target = $region20
      $region19: #{tpu_custom_call.1} parent=11 // pred_region
        _
      $region20: #{tpu_custom_call.1} parent=11 // pred_fallthru
        _
      // Predicated region
      $region21: #{tpu_custom_call.1} parent=11 // pred_check
        %p463 = pneg %p127
      $region22: #{tpu_custom_call.1} parent=11 // pred_check_branch
        %465 = sbr.rel (%p463) target = $region24
      $region23: #{tpu_custom_call.1} parent=11 // pred_region
        _
      $region24: #{tpu_custom_call.1} parent=11 // pred_fallthru
        _
      // Predicated region
      $region25: #{tpu_custom_call.1} parent=11 // pred_check
        %p466 = pneg %p148
      $region26: #{tpu_custom_call.1} parent=11 // pred_check_branch
        %468 = sbr.rel (%p466) target = $region28
      $region27: #{tpu_custom_call.1} parent=11 // pred_region
        _
      $region28: #{tpu_custom_call.1} parent=11 // pred_fallthru
        _
      // Predicated region
      $region29: #{tpu_custom_call.1} parent=11 // pred_check
        %p469 = pneg %p169
      $region30: #{tpu_custom_call.1} parent=11 // pred_check_branch
        %471 = sbr.rel (%p469) target = $region32
      $region31: #{tpu_custom_call.1} parent=11 // pred_region
        _
      $region32: #{tpu_custom_call.1} parent=11 // pred_fallthru
        _
      // Predicated region
      $region33: #{tpu_custom_call.1} parent=11 // pred_check
        %p472 = pneg %p190
      $region34: #{tpu_custom_call.1} parent=11 // pred_check_branch
        %474 = sbr.rel (%p472) target = $region36
      $region35: #{tpu_custom_call.1} parent=11 // pred_region
        _
      $region36: #{tpu_custom_call.1} parent=11 // pred_fallthru
        _
      // Predicated region
      $region37: #{tpu_custom_call.1} parent=11 // pred_check
        %p475 = pneg %p211
      $region38: #{tpu_custom_call.1} parent=11 // pred_check_branch
        %477 = sbr.rel (%p475) target = $region40
      $region39: #{tpu_custom_call.1} parent=11 // pred_region
        _
      $region40: #{tpu_custom_call.1} parent=11 // pred_fallthru
        _
      // Predicated region
      $region41: #{tpu_custom_call.1} parent=11 // pred_check
        %p478 = pneg %p232
      $region42: #{tpu_custom_call.1} parent=11 // pred_check_branch
        %480 = sbr.rel (%p478) target = $region44
      $region43: #{tpu_custom_call.1} parent=11 // pred_region
        _
      $region44: #{tpu_custom_call.1} parent=11 // pred_fallthru
        _
      // Predicated region
      $region45: #{tpu_custom_call.1} parent=11 // pred_check
        %p481 = pneg %p253
      $region46: #{tpu_custom_call.1} parent=11 // pred_check_branch
        %483 = sbr.rel (%p481) target = $region48
      $region47: #{tpu_custom_call.1} parent=11 // pred_region
        _
      $region48: #{tpu_custom_call.1} parent=11 // pred_fallthru
        _
      // Predicated region
      $region49: #{tpu_custom_call.1} parent=11 // pred_check
        %p484 = pneg %p274
      $region50: #{tpu_custom_call.1} parent=11 // pred_check_branch
        %486 = sbr.rel (%p484) target = $region52
      $region51: #{tpu_custom_call.1} parent=11 // pred_region
        _
      $region52: #{tpu_custom_call.1} parent=11 // pred_fallthru
        _
      // Predicated region
      $region53: #{tpu_custom_call.1} parent=11 // pred_check
        %p487 = pneg %p295
      $region54: #{tpu_custom_call.1} parent=11 // pred_check_branch
        %489 = sbr.rel (%p487) target = $region56
      $region55: #{tpu_custom_call.1} parent=11 // pred_region
        _
      $region56: #{tpu_custom_call.1} parent=11 // pred_fallthru
        _
      // Predicated region
      $region57: #{tpu_custom_call.1} parent=11 // pred_check
        %p490 = pneg %p316
      $region58: #{tpu_custom_call.1} parent=11 // pred_check_branch
        %492 = sbr.rel (%p490) target = $region60
      $region59: #{tpu_custom_call.1} parent=11 // pred_region
        _
      $region60: #{tpu_custom_call.1} parent=11 // pred_fallthru
        _
      // Predicated region
      $region61: #{tpu_custom_call.1} parent=11 // pred_check
        %p493 = pneg %p337
      $region62: #{tpu_custom_call.1} parent=11 // pred_check_branch
        %495 = sbr.rel (%p493) target = $region64
      $region63: #{tpu_custom_call.1} parent=11 // pred_region
        _
      $region64: #{tpu_custom_call.1} parent=11 // pred_fallthru
        _
      // Predicated region
      $region65: #{tpu_custom_call.1} parent=11 // pred_check
        %p496 = pneg %p358
      $region66: #{tpu_custom_call.1} parent=11 // pred_check_branch
        %498 = sbr.rel (%p496) target = $region68
      $region67: #{tpu_custom_call.1} parent=11 // pred_region
        _
      $region68: #{tpu_custom_call.1} parent=11 // pred_fallthru
        _
    $region12: #{tpu_custom_call.1} parent=5 // pred_fallthru
      _
    %p499 = scmp.lt.s32.totalorder %s24, 2
    // Predicated region
    $region69: #{tpu_custom_call.1} parent=5 // pred_check
      %p500 = pneg %p499
    $region70: #{tpu_custom_call.1} parent=5 // pred_check_branch
      %502 = sbr.rel (%p500) target = $region72
    $region71: #{tpu_custom_call.1} parent=5 // pred_region
      // Predicated region
      $region73: #{tpu_custom_call.1} parent=71 // pred_check
        %p503 = pneg %p58
      $region74: #{tpu_custom_call.1} parent=71 // pred_check_branch
        %505 = sbr.rel (%p503) target = $region76
      $region75: #{tpu_custom_call.1} parent=71 // pred_region
        %s506 = smul.u32 2, %s32
        %p507 = scmp.lt.s32.totalorder %s31, 1
        %s508 = scalar_select %p507, %s31, 1
        %p509 = scmp.lt.s32.totalorder %s506, 1
        %s510 = scalar_select %p509, %s506, 1
        %s511 = smul.addr %s508, 6
        %s512 = sadd.s32 %s510, %s511
        %s513 = smul.addr %s512, 8
        %s514 = scalar_lea.vmem %s0, %s513
        %s515 = smul.u32 2, %s32
      $region76: #{tpu_custom_call.1} parent=71 // pred_fallthru
        _
    $region72: #{tpu_custom_call.1} parent=5 // pred_fallthru
      _
    %p516 = scmp.le.s32.totalorder 1, %s24
    %p517 = scmp.lt.s32.totalorder %s24, 3
    %p518 = pnand %p516, %p517
    %p519 = pneg %p518
    // Predicated region
    $region77: #{tpu_custom_call.1} parent=5 // pred_check
      _
    $region78: #{tpu_custom_call.1} parent=5 // pred_check_branch
      %521 = sbr.rel (%p518) target = $region80
    $region79: #{tpu_custom_call.1} parent=5 // pred_region
      %s522 = ssub.s32 %s24, 1
      %s523 = smul.u32 2, %s34
      %p524 = scmp.lt.s32.totalorder %s33, 1
      %s525 = scalar_select %p524, %s33, 1
      %p526 = scmp.lt.s32.totalorder %s523, 1
      %s527 = scalar_select %p526, %s523, 1
      %s528 = smul.addr %s525, 6
      %s529 = sadd.s32 %s527, %s528
      %s530 = smul.addr %s529, 8
      %s531 = scalar_lea.vmem %s0, %s530
      %p532 = pneg %p64
      %p533 = pneg %p61
      %p534 = pneg %p85
      %p535 = pneg %p82
      %p536 = pneg %p106
      %p537 = pneg %p103
      %p538 = pneg %p127
      %p539 = pneg %p124
      %p540 = pneg %p148
      %p541 = pneg %p145
      %p542 = pneg %p169
      %p543 = pneg %p166
      %p544 = pneg %p190
      %p545 = pneg %p187
      %p546 = pneg %p211
      %p547 = pneg %p208
      %p548 = pneg %p232
      %p549 = pneg %p229
      %p550 = pneg %p253
      %p551 = pneg %p250
      %p552 = pneg %p274
      %p553 = pneg %p271
      %p554 = pneg %p295
      %p555 = pneg %p292
      %p556 = pneg %p316
      %p557 = pneg %p313
      %p558 = pneg %p337
      %p559 = pneg %p334
      %p560 = pneg %p358
      %p561 = pneg %p355
      %p562 = pneg %p386
      %p563 = pneg %p383
      %s564 = smul.u32 2, %s34
      %p565 = scmp.lt.s32.totalorder %s33, 1
      %s566 = scalar_select %p565, %s33, 1
      %p567 = scmp.lt.s32.totalorder %s564, 1
      %s568 = scalar_select %p567, %s564, 1
      %s569 = smul.addr %s566, 4
      %s570 = sadd.s32 %s568, %s569
      %s571 = smul.addr %s570, 8
      %s572 = scalar_lea.vmem %s15, %s571
      %p573 = pneg %p414
      %p574 = pneg %p411
      %s575 = smul.u32 2, %s34
      %p576 = scmp.lt.s32.totalorder %s33, 1
      %s577 = scalar_select %p576, %s33, 1
      %p578 = scmp.lt.s32.totalorder %s575, 1
      %s579 = scalar_select %p578, %s575, 1
      %s580 = smul.addr %s577, 4
      %s581 = sadd.s32 %s579, %s580
      %s582 = smul.addr %s581, 8
      %s583 = scalar_lea.vmem %s16, %s582
      %p584 = pneg %p442
      %p585 = pneg %p439
      %s586 = smul.u32 2, %s34
      %p587 = scmp.lt.s32.totalorder %s33, 1
      %s588 = scalar_select %p587, %s33, 1
      %p589 = scmp.lt.s32.totalorder %s586, 1
      %s590 = scalar_select %p589, %s586, 1
      %s591 = smul.addr %s588, 4
      %s592 = sadd.s32 %s590, %s591
      %s593 = smul.addr %s592, 8
      %s594 = scalar_lea.vmem %s17, %s593
      %s595 = smul.u32 2, %s34
      %p596 = scmp.lt.s32.totalorder %s33, 1
      %s597 = scalar_select %p596, %s33, 1
      %p598 = scmp.lt.s32.totalorder %s595, 1
      %s599 = scalar_select %p598, %s595, 1
      %s600 = smul.addr %s597, 6
      %s601 = sadd.s32 %s599, %s600
      %s602 = smul.addr %s601, 8
      %s603 = scalar_lea.vmem %s0, %s602
      %s604 = smul.u32 2, %s34
      %s605 = smul.u32 2, %s34
      %p606 = scmp.lt.s32.totalorder %s33, 1
      %s607 = scalar_select %p606, %s33, 1
      %p608 = scmp.lt.s32.totalorder %s605, 1
      %s609 = scalar_select %p608, %s605, 1
      %s610 = smul.addr %s607, 4
      %s611 = sadd.s32 %s609, %s610
      %s612 = smul.addr %s611, 8
      %s613 = scalar_lea.vmem %s15, %s612
      %s614 = smul.u32 2, %s34
      %s615 = smul.u32 2, %s34
      %p616 = scmp.lt.s32.totalorder %s33, 1
      %s617 = scalar_select %p616, %s33, 1
      %p618 = scmp.lt.s32.totalorder %s615, 1
      %s619 = scalar_select %p618, %s615, 1
      %s620 = smul.addr %s617, 4
      %s621 = sadd.s32 %s619, %s620
      %s622 = smul.addr %s621, 8
      %s623 = scalar_lea.vmem %s16, %s622
      %s624 = smul.u32 2, %s34
      %s625 = smul.u32 2, %s34
      %p626 = scmp.lt.s32.totalorder %s33, 1
      %s627 = scalar_select %p626, %s33, 1
      %p628 = scmp.lt.s32.totalorder %s625, 1
      %s629 = scalar_select %p628, %s625, 1
      %s630 = smul.addr %s627, 4
      %s631 = sadd.s32 %s629, %s630
      %s632 = smul.addr %s631, 8
      %s633 = scalar_lea.vmem %s17, %s632
      %s634 = smul.u32 2, %s34
      %v635 = vld [vmem:[%s603] sm:$0xff]
      %v636 = vld [vmem:[%s603 + $0x8] sm:$0xff]
      %v637 = vld [vmem:[%s603 + $0x10] sm:$0xff]
      %v638 = vld [vmem:[%s603 + $0x18] sm:$0xff]
      %v639 = vld [vmem:[%s603 + $0x20] sm:$0xff]
      %v640 = vld [vmem:[%s603 + $0x28] sm:$0xff]
      %v641 = vld [vmem:[%s1] sm:$0xff]
      %v642 = vld [vmem:[%s1 + $0x8] sm:$0xff]
      %v643 = vld [vmem:[%s1 + $0x10] sm:$0xff]
      %v644 = vld [vmem:[%s1 + $0x18] sm:$0xff]
      %v645 = vld [vmem:[%s1 + $0x20] sm:$0xff]
      %v646 = vld [vmem:[%s1 + $0x28] sm:$0xff]
      %v647 = vld [vmem:[%s1 + $0x30] sm:$0xff]
      %v648 = vld [vmem:[%s1 + $0x38] sm:$0xff]
      %v649 = vld [vmem:[%s1 + $0x40] sm:$0xff]
      %v650 = vld [vmem:[%s2] sm:$0xff]
      %v651 = vld [vmem:[%s2 + $0x8] sm:$0xff]
      %v652 = vld [vmem:[%s2 + $0x10] sm:$0xff]
      %v653 = vld [vmem:[%s2 + $0x18] sm:$0xff]
      %v654 = vld [vmem:[%s2 + $0x20] sm:$0xff]
      %v655 = vld [vmem:[%s2 + $0x28] sm:$0xff]
      %v656 = vld [vmem:[%s2 + $0x30] sm:$0xff]
      %v657 = vld [vmem:[%s2 + $0x38] sm:$0xff]
      %v658 = vld [vmem:[%s2 + $0x40] sm:$0xff]
      %660 = vset.pattern.permute.xlu0 0
      %661 = vperm.xlu0 %660, %v650
      %v662 = vpop.permute.xlu0 %661
      %665 = vset.pattern.permute.xlu0 0
      %666 = vperm.xlu0 %665, %v651
      %v667 = vpop.permute.xlu0 %666
      %670 = vset.pattern.permute.xlu0 0
      %671 = vperm.xlu0 %670, %v652
      %v672 = vpop.permute.xlu0 %671
      %675 = vset.pattern.permute.xlu0 0
      %676 = vperm.xlu0 %675, %v653
      %v677 = vpop.permute.xlu0 %676
      %680 = vset.pattern.permute.xlu0 0
      %681 = vperm.xlu0 %680, %v654
      %v682 = vpop.permute.xlu0 %681
      %685 = vset.pattern.permute.xlu0 0
      %686 = vperm.xlu0 %685, %v655
      %v687 = vpop.permute.xlu0 %686
      %690 = vset.pattern.permute.xlu0 0
      %691 = vperm.xlu0 %690, %v656
      %v692 = vpop.permute.xlu0 %691
      %695 = vset.pattern.permute.xlu0 0
      %696 = vperm.xlu0 %695, %v657
      %v697 = vpop.permute.xlu0 %696
      %700 = vset.pattern.permute.xlu0 0
      %701 = vperm.xlu0 %700, %v658
      %v702 = vpop.permute.xlu0 %701
      %vm704 = vcmask 195584
      %v706 = vsel %vm704, %v641, 0
      %v709 = vsel %vm704, %v642, 0
      %v712 = vsel %vm704, %v643, 0
      %v715 = vsel %vm704, %v644, 0
      %v718 = vsel %vm704, %v645, 0
      %v721 = vsel %vm704, %v646, 0
      %v724 = vsel %vm704, %v647, 0
      %v727 = vsel %vm704, %v648, 0
      %v730 = vsel %vm704, %v649, 0
      %732 = vmatprep.subr.mxu0 %v636
      %733 = vmatpush1.msra.mxu0 %v635
      %734 = vmatprep.subr.mxu0 %v638
      %735 = vmatpush1.msra.mxu0 %v637
      %736 = vmatprep.subr.mxu0 %v640
      %737 = vmatpush1.msra.mxu0 %v639
      %738 = vmatprep.subr.mxu0 0.0
      %739 = vmatpush1.msra.mxu0 0.0
      %740 = vmatprep.subr.mxu0 0.0
      %741 = vmatpush1.msra.mxu0 0.0
      %742 = vmatprep.subr.mxu0 0.0
      %743 = vmatpush1.msra.mxu0 0.0
      %744 = vmatprep.subr.mxu0 0.0
      %745 = vmatpush1.msra.mxu0 0.0
      %746 = vmatprep.subr.mxu0 0.0
      %747 = vmatpush1.msra.mxu0 0.0
      %748 = vmatprep.subr.mxu0 0.0
      %749 = vmatpush1.msra.mxu0 0.0
      %750 = vmatprep.subr.mxu0 0.0
      %751 = vmatpush1.msra.mxu0 0.0
      %752 = vmatprep.subr.mxu0 0.0
      %753 = vmatpush1.msra.mxu0 0.0
      %754 = vmatprep.subr.mxu0 0.0
      %755 = vmatpush1.msra.mxu0 0.0
      %756 = vmatprep.subr.mxu0 0.0
      %757 = vmatpush1.msra.mxu0 0.0
      %758 = vmatprep.subr.mxu0 0.0
      %759 = vmatpush1.msra.mxu0 0.0
      %760 = vmatprep.subr.mxu0 0.0
      %761 = vmatpush1.msra.mxu0 0.0
      %762 = vmatprep.subr.mxu0 0.0
      %763 = vmatpush1.msra.mxu0 0.0
      %764 = vmatprep.subr.mxu0 0.0
      %765 = vmatpush1.msra.mxu0 0.0
      %766 = vmatprep.subr.mxu0 0.0
      %767 = vmatpush1.msra.mxu0 0.0
      %768 = vmatprep.subr.mxu0 0.0
      %769 = vmatpush1.msra.mxu0 0.0
      %770 = vmatprep.subr.mxu0 0.0
      %771 = vmatpush1.msra.mxu0 0.0
      %772 = vmatprep.subr.mxu0 0.0
      %773 = vmatpush1.msra.mxu0 0.0
      %774 = vmatprep.subr.mxu0 0.0
      %775 = vmatpush1.msra.mxu0 0.0
      %776 = vmatprep.subr.mxu0 0.0
      %777 = vmatpush1.msra.mxu0 0.0
      %778 = vmatprep.subr.mxu0 0.0
      %779 = vmatpush1.msra.mxu0 0.0
      %780 = vmatprep.subr.mxu0 0.0
      %781 = vmatpush1.msra.mxu0 0.0
      %782 = vmatprep.subr.mxu0 0.0
      %783 = vmatpush1.msra.mxu0 0.0
      %784 = vmatprep.subr.mxu0 0.0
      %785 = vmatpush1.msra.mxu0 0.0
      %786 = vmatprep.subr.mxu0 0.0
      %787 = vmatpush1.msra.mxu0 0.0
      %788 = vmatprep.subr.mxu0 0.0
      %789 = vmatpush1.msra.mxu0 0.0
      %790 = vmatprep.subr.mxu0 0.0
      %791 = vmatpush1.msra.mxu0 0.0
      %792 = vmatprep.subr.mxu0 0.0
      %793 = vmatpush1.msra.mxu0 0.0
      %794 = vmatprep.subr.mxu0 0.0
      %795 = vmatpush1.msra.mxu0 0.0
      %796 = vmatprep.mubr.f32.mxu0 0.0
      %797 = vmatmul.mubr.f32.gmra.mrb[0].mxu0 %v706
      %v798 = vpop.f32.mrb[0].mxu0
      %v799 = vadd.f32 %v662, %v798
      %v800 = vpop.f32.mrb[0].mxu0
      %v801 = vadd.f32 %v662, %v800
      %802 = vmatprep.mubr.f32.mxu0 0.0
      %803 = vmatmul.mubr.f32.gmra.mrb[0].mxu0 %v709
      %v804 = vpop.f32.mrb[0].mxu0
      %v805 = vadd.f32 %v667, %v804
      %v806 = vpop.f32.mrb[0].mxu0
      %v807 = vadd.f32 %v667, %v806
      %808 = vmatprep.mubr.f32.mxu0 0.0
      %809 = vmatmul.mubr.f32.gmra.mrb[0].mxu0 %v712
      %v810 = vpop.f32.mrb[0].mxu0
      %v811 = vadd.f32 %v672, %v810
      %v812 = vpop.f32.mrb[0].mxu0
      %v813 = vadd.f32 %v672, %v812
      %814 = vmatprep.mubr.f32.mxu0 0.0
      %815 = vmatmul.mubr.f32.gmra.mrb[0].mxu0 %v715
      %v816 = vpop.f32.mrb[0].mxu0
      %v817 = vadd.f32 %v677, %v816
      %v818 = vpop.f32.mrb[0].mxu0
      %v819 = vadd.f32 %v677, %v818
      %820 = vmatprep.mubr.f32.mxu0 0.0
      %821 = vmatmul.mubr.f32.gmra.mrb[0].mxu0 %v718
      %v822 = vpop.f32.mrb[0].mxu0
      %v823 = vadd.f32 %v682, %v822
      %v824 = vpop.f32.mrb[0].mxu0
      %v825 = vadd.f32 %v682, %v824
      %826 = vmatprep.mubr.f32.mxu0 0.0
      %827 = vmatmul.mubr.f32.gmra.mrb[0].mxu0 %v721
      %v828 = vpop.f32.mrb[0].mxu0
      %v829 = vadd.f32 %v687, %v828
      %v830 = vpop.f32.mrb[0].mxu0
      %v831 = vadd.f32 %v687, %v830
      %832 = vmatprep.mubr.f32.mxu0 0.0
      %833 = vmatmul.mubr.f32.gmra.mrb[0].mxu0 %v724
      %v834 = vpop.f32.mrb[0].mxu0
      %v835 = vadd.f32 %v692, %v834
      %v836 = vpop.f32.mrb[0].mxu0
      %v837 = vadd.f32 %v692, %v836
      %838 = vmatprep.mubr.f32.mxu0 0.0
      %839 = vmatmul.mubr.f32.gmra.mrb[0].mxu0 %v727
      %v840 = vpop.f32.mrb[0].mxu0
      %v841 = vadd.f32 %v697, %v840
      %v842 = vpop.f32.mrb[0].mxu0
      %v843 = vadd.f32 %v697, %v842
      %844 = vmatprep.mubr.f32.mxu0 0.0
      %845 = vmatmul.mubr.f32.gmra.mrb[0].mxu0 %v730
      %v846 = vpop.f32.mrb[0].mxu0
      %v847 = vadd.f32 %v702, %v846
      %v848 = vpop.f32.mrb[0].mxu0
      %v849 = vadd.f32 %v702, %v848
      %850 = vdwg.mxu0
      %v851 = vmax.f32 %v799, 0.0
      %v852 = vmax.f32 %v801, 0.0
      %v853 = vmax.f32 %v805, 0.0
      %v854 = vmax.f32 %v807, 0.0
      %v855 = vmax.f32 %v811, 0.0
      %v856 = vmax.f32 %v813, 0.0
      %vm857 = vcmp.ge.f32.partialorder %v817, 0.0
      %vm858 = vcmp.ge.f32.partialorder %v819, 0.0
      %vm859 = vcmp.ge.f32.partialorder %v823, 0.0
      %vm860 = vcmp.ge.f32.partialorder %v825, 0.0
      %vm861 = vcmp.ge.f32.partialorder %v829, 0.0
      %vm862 = vcmp.ge.f32.partialorder %v831, 0.0
      %v863 = vmul.f32 %v817, 0.01
      %v864 = vmul.f32 %v819, 0.01
      %v865 = vmul.f32 %v823, 0.01
      %v866 = vmul.f32 %v825, 0.01
      %v867 = vmul.f32 %v829, 0.01
      %v868 = vmul.f32 %v831, 0.01
      %v869 = vsel %vm857, %v817, %v863
      %v870 = vsel %vm858, %v819, %v864
      %v871 = vsel %vm859, %v823, %v865
      %v872 = vsel %vm860, %v825, %v866
      %v873 = vsel %vm861, %v829, %v867
      %v874 = vsel %vm862, %v831, %v868
      %vm875 = vcmp.ge.f32.partialorder %v835, 0.0
      %vm876 = vcmp.ge.f32.partialorder %v837, 0.0
      %vm877 = vcmp.ge.f32.partialorder %v841, 0.0
      %vm878 = vcmp.ge.f32.partialorder %v843, 0.0
      %vm879 = vcmp.ge.f32.partialorder %v847, 0.0
      %vm880 = vcmp.ge.f32.partialorder %v849, 0.0
      %v881 = vmul.f32 %v835, 0.01
      %v882 = vmul.f32 %v837, 0.01
      %v883 = vmul.f32 %v841, 0.01
      %v884 = vmul.f32 %v843, 0.01
      %v885 = vmul.f32 %v847, 0.01
      %v886 = vmul.f32 %v849, 0.01
      %v887 = vsel %vm875, %v835, %v881
      %v888 = vsel %vm876, %v837, %v882
      %v889 = vsel %vm877, %v841, %v883
      %v890 = vsel %vm878, %v843, %v884
      %v891 = vsel %vm879, %v847, %v885
      %v892 = vsel %vm880, %v849, %v886
      %v893 = vld [vmem:[%s3] sm:$0xff]
      %v894 = vld [vmem:[%s3 + $0x8] sm:$0xff]
      %v895 = vld [vmem:[%s4] sm:$0xff]
      %v896 = vld [vmem:[%s4 + $0x8] sm:$0xff]
      %898 = vset.pattern.permute.xlu0 0
      %899 = vperm.xlu0 %898, %v895
      %v900 = vpop.permute.xlu0 %899
      %903 = vset.pattern.permute.xlu0 0
      %904 = vperm.xlu0 %903, %v896
      %v905 = vpop.permute.xlu0 %904
      %v908 = vsel %vm704, %v893, 0
      %v911 = vsel %vm704, %v894, 0
      %913 = vmatprep.subr.mxu0 %v852
      %914 = vmatpush1.msra.mxu0 %v851
      %915 = vmatprep.subr.mxu0 %v854
      %916 = vmatpush1.msra.mxu0 %v853
      %917 = vmatprep.subr.mxu0 %v856
      %918 = vmatpush1.msra.mxu0 %v855
      %919 = vmatprep.subr.mxu0 0.0
      %920 = vmatpush1.msra.mxu0 0.0
      %921 = vmatprep.subr.mxu0 0.0
      %922 = vmatpush1.msra.mxu0 0.0
      %923 = vmatprep.subr.mxu0 0.0
      %924 = vmatpush1.msra.mxu0 0.0
      %925 = vmatprep.subr.mxu0 0.0
      %926 = vmatpush1.msra.mxu0 0.0
      %927 = vmatprep.subr.mxu0 0.0
      %928 = vmatpush1.msra.mxu0 0.0
      %929 = vmatprep.subr.mxu0 0.0
      %930 = vmatpush1.msra.mxu0 0.0
      %931 = vmatprep.subr.mxu0 0.0
      %932 = vmatpush1.msra.mxu0 0.0
      %933 = vmatprep.subr.mxu0 0.0
      %934 = vmatpush1.msra.mxu0 0.0
      %935 = vmatprep.subr.mxu0 0.0
      %936 = vmatpush1.msra.mxu0 0.0
      %937 = vmatprep.subr.mxu0 0.0
      %938 = vmatpush1.msra.mxu0 0.0
      %939 = vmatprep.subr.mxu0 0.0
      %940 = vmatpush1.msra.mxu0 0.0
      %941 = vmatprep.subr.mxu0 0.0
      %942 = vmatpush1.msra.mxu0 0.0
      %943 = vmatprep.subr.mxu0 0.0
      %944 = vmatpush1.msra.mxu0 0.0
      %945 = vmatprep.subr.mxu0 0.0
      %946 = vmatpush1.msra.mxu0 0.0
      %947 = vmatprep.subr.mxu0 0.0
      %948 = vmatpush1.msra.mxu0 0.0
      %949 = vmatprep.subr.mxu0 0.0
      %950 = vmatpush1.msra.mxu0 0.0
      %951 = vmatprep.subr.mxu0 0.0
      %952 = vmatpush1.msra.mxu0 0.0
      %953 = vmatprep.subr.mxu0 0.0
      %954 = vmatpush1.msra.mxu0 0.0
      %955 = vmatprep.subr.mxu0 0.0
      %956 = vmatpush1.msra.mxu0 0.0
      %957 = vmatprep.subr.mxu0 0.0
      %958 = vmatpush1.msra.mxu0 0.0
      %959 = vmatprep.subr.mxu0 0.0
      %960 = vmatpush1.msra.mxu0 0.0
      %961 = vmatprep.subr.mxu0 0.0
      %962 = vmatpush1.msra.mxu0 0.0
      %963 = vmatprep.subr.mxu0 0.0
      %964 = vmatpush1.msra.mxu0 0.0
      %965 = vmatprep.subr.mxu0 0.0
      %966 = vmatpush1.msra.mxu0 0.0
      %967 = vmatprep.subr.mxu0 0.0
      %968 = vmatpush1.msra.mxu0 0.0
      %969 = vmatprep.subr.mxu0 0.0
      %970 = vmatpush1.msra.mxu0 0.0
      %971 = vmatprep.subr.mxu0 0.0
      %972 = vmatpush1.msra.mxu0 0.0
      %973 = vmatprep.subr.mxu0 0.0
      %974 = vmatpush1.msra.mxu0 0.0
      %975 = vmatprep.subr.mxu0 0.0
      %976 = vmatpush1.msra.mxu0 0.0
      %977 = vmatprep.mubr.f32.mxu0 0.0
      %978 = vmatmul.mubr.f32.gmra.mrb[0].mxu0 %v908
      %v979 = vpop.f32.mrb[0].mxu0
      %v980 = vadd.f32 %v900, %v979
      %v981 = vpop.f32.mrb[0].mxu0
      %v982 = vadd.f32 %v900, %v981
      %983 = vmatprep.mubr.f32.mxu0 0.0
      %984 = vmatmul.mubr.f32.gmra.mrb[0].mxu0 %v911
      %v985 = vpop.f32.mrb[0].mxu0
      %v986 = vadd.f32 %v905, %v985
      %v987 = vpop.f32.mrb[0].mxu0
      %v988 = vadd.f32 %v905, %v987
      %989 = vdwg.mxu0
      %v990 = vmax.f32 %v980, 0.0
      %v991 = vmax.f32 %v982, 0.0
      %v992 = vmax.f32 %v986, 0.0
      %v993 = vmax.f32 %v988, 0.0
      %v994 = vld [vmem:[%s5] sm:$0xff]
      %v995 = vld [vmem:[%s5 + $0x8] sm:$0xf]
      %v996 = vld [vmem:[%s6] sm:$0xff]
      %v997 = vld [vmem:[%s6 + $0x8] sm:$0xf]
      %999 = vset.pattern.permute.xlu0 0
      %1000 = vperm.xlu0 %999, %v996
      %v1001 = vpop.permute.xlu0 %1000
      %1004 = vset.pattern.permute.xlu0 0
      %1005 = vperm.xlu0 %1004, %v997
      %v1006 = vpop.permute.xlu0 %1005
      %vm1008 = vcmask 130048
      %v1010 = vsel %vm1008, %v994, 0
      %v1013 = vsel %vm1008, %v995, 0
      %1015 = vmatprep.subr.mxu0 %v991
      %1016 = vmatpush1.msra.mxu0 %v990
      %1017 = vmatprep.subr.mxu0 %v993
      %1018 = vmatpush1.msra.mxu0 %v992
      %1019 = vmatprep.subr.mxu0 0.0
      %1020 = vmatpush1.msra.mxu0 0.0
      %1021 = vmatprep.subr.mxu0 0.0
      %1022 = vmatpush1.msra.mxu0 0.0
      %1023 = vmatprep.subr.mxu0 0.0
      %1024 = vmatpush1.msra.mxu0 0.0
      %1025 = vmatprep.subr.mxu0 0.0
      %1026 = vmatpush1.msra.mxu0 0.0
      %1027 = vmatprep.subr.mxu0 0.0
      %1028 = vmatpush1.msra.mxu0 0.0
      %1029 = vmatprep.subr.mxu0 0.0
      %1030 = vmatpush1.msra.mxu0 0.0
      %1031 = vmatprep.subr.mxu0 0.0
      %1032 = vmatpush1.msra.mxu0 0.0
      %1033 = vmatprep.subr.mxu0 0.0
      %1034 = vmatpush1.msra.mxu0 0.0
      %1035 = vmatprep.subr.mxu0 0.0
      %1036 = vmatpush1.msra.mxu0 0.0
      %1037 = vmatprep.subr.mxu0 0.0
      %1038 = vmatpush1.msra.mxu0 0.0
      %1039 = vmatprep.subr.mxu0 0.0
      %1040 = vmatpush1.msra.mxu0 0.0
      %1041 = vmatprep.subr.mxu0 0.0
      %1042 = vmatpush1.msra.mxu0 0.0
      %1043 = vmatprep.subr.mxu0 0.0
      %1044 = vmatpush1.msra.mxu0 0.0
      %1045 = vmatprep.subr.mxu0 0.0
      %1046 = vmatpush1.msra.mxu0 0.0
      %1047 = vmatprep.subr.mxu0 0.0
      %1048 = vmatpush1.msra.mxu0 0.0
      %1049 = vmatprep.subr.mxu0 0.0
      %1050 = vmatpush1.msra.mxu0 0.0
      %1051 = vmatprep.subr.mxu0 0.0
      %1052 = vmatpush1.msra.mxu0 0.0
      %1053 = vmatprep.subr.mxu0 0.0
      %1054 = vmatpush1.msra.mxu0 0.0
      %1055 = vmatprep.subr.mxu0 0.0
      %1056 = vmatpush1.msra.mxu0 0.0
      %1057 = vmatprep.subr.mxu0 0.0
      %1058 = vmatpush1.msra.mxu0 0.0
      %1059 = vmatprep.subr.mxu0 0.0
      %1060 = vmatpush1.msra.mxu0 0.0
      %1061 = vmatprep.subr.mxu0 0.0
      %1062 = vmatpush1.msra.mxu0 0.0
      %1063 = vmatprep.subr.mxu0 0.0
      %1064 = vmatpush1.msra.mxu0 0.0
      %1065 = vmatprep.subr.mxu0 0.0
      %1066 = vmatpush1.msra.mxu0 0.0
      %1067 = vmatprep.subr.mxu0 0.0
      %1068 = vmatpush1.msra.mxu0 0.0
      %1069 = vmatprep.subr.mxu0 0.0
      %1070 = vmatpush1.msra.mxu0 0.0
      %1071 = vmatprep.subr.mxu0 0.0
      %1072 = vmatpush1.msra.mxu0 0.0
      %1073 = vmatprep.subr.mxu0 0.0
      %1074 = vmatpush1.msra.mxu0 0.0
      %1075 = vmatprep.subr.mxu0 0.0
      %1076 = vmatpush1.msra.mxu0 0.0
      %1077 = vmatprep.subr.mxu0 0.0
      %1078 = vmatpush1.msra.mxu0 0.0
      %1079 = vmatprep.mubr.f32.mxu0 0.0
      %1080 = vmatmul.mubr.f32.gmra.mrb[0].mxu0 %v1010
      %v1081 = vpop.f32.mrb[0].mxu0
      %v1082 = vadd.f32 %v1001, %v1081
      %v1083 = vpop.f32.mrb[0].mxu0
      %v1084 = vadd.f32 %v1001, %v1083
      %1085 = vmatprep.mubr.f32.mxu0 0.0
      %1086 = vmatmul.mubr.f32.gmra.mrb[0].mxu0 %v1013
      %v1087 = vpop.f32.mrb[0].mxu0
      %v1088 = vadd.f32 %v1006, %v1087
      %v1089 = vpop.f32.mrb[0].mxu0
      %v1090 = vadd.f32 %v1006, %v1089
      %1091 = vdwg.mxu0
      %v1092 = vmax.f32 %v1082, 0.0
      %v1093 = vmax.f32 %v1084, 0.0
      %v1094 = vmax.f32 %v1088, 0.0
      %v1095 = vmax.f32 %v1090, 0.0
      %1096 = vst [vmem:[%s613] sm:$0xff] %v1092
      %1097 = vst [vmem:[%s613 + $0x8] sm:$0xff] %v1093
      %1098 = vst [vmem:[%s613 + $0x10] sm:$0xf] %v1094
      %1099 = vst [vmem:[%s613 + $0x18] sm:$0xf] %v1095
      %v1100 = vld [vmem:[%s7] sm:$0xff]
      %v1101 = vld [vmem:[%s7 + $0x8] sm:$0xff]
      %v1102 = vld [vmem:[%s8] sm:$0xff]
      %v1103 = vld [vmem:[%s8 + $0x8] sm:$0xff]
      %1105 = vset.pattern.permute.xlu0 0
      %1106 = vperm.xlu0 %1105, %v1102
      %v1107 = vpop.permute.xlu0 %1106
      %1110 = vset.pattern.permute.xlu0 0
      %1111 = vperm.xlu0 %1110, %v1103
      %v1112 = vpop.permute.xlu0 %1111
      %v1115 = vsel %vm704, %v1100, 0
      %v1118 = vsel %vm704, %v1101, 0
      %1120 = vmatprep.subr.mxu0 %v870
      %1121 = vmatpush1.msra.mxu0 %v869
      %1122 = vmatprep.subr.mxu0 %v872
      %1123 = vmatpush1.msra.mxu0 %v871
      %1124 = vmatprep.subr.mxu0 %v874
      %1125 = vmatpush1.msra.mxu0 %v873
      %1126 = vmatprep.subr.mxu0 0.0
      %1127 = vmatpush1.msra.mxu0 0.0
      %1128 = vmatprep.subr.mxu0 0.0
      %1129 = vmatpush1.msra.mxu0 0.0
      %1130 = vmatprep.subr.mxu0 0.0
      %1131 = vmatpush1.msra.mxu0 0.0
      %1132 = vmatprep.subr.mxu0 0.0
      %1133 = vmatpush1.msra.mxu0 0.0
      %1134 = vmatprep.subr.mxu0 0.0
      %1135 = vmatpush1.msra.mxu0 0.0
      %1136 = vmatprep.subr.mxu0 0.0
      %1137 = vmatpush1.msra.mxu0 0.0
      %1138 = vmatprep.subr.mxu0 0.0
      %1139 = vmatpush1.msra.mxu0 0.0
      %1140 = vmatprep.subr.mxu0 0.0
      %1141 = vmatpush1.msra.mxu0 0.0
      %1142 = vmatprep.subr.mxu0 0.0
      %1143 = vmatpush1.msra.mxu0 0.0
      %1144 = vmatprep.subr.mxu0 0.0
      %1145 = vmatpush1.msra.mxu0 0.0
      %1146 = vmatprep.subr.mxu0 0.0
      %1147 = vmatpush1.msra.mxu0 0.0
      %1148 = vmatprep.subr.mxu0 0.0
      %1149 = vmatpush1.msra.mxu0 0.0
      %1150 = vmatprep.subr.mxu0 0.0
      %1151 = vmatpush1.msra.mxu0 0.0
      %1152 = vmatprep.subr.mxu0 0.0
      %1153 = vmatpush1.msra.mxu0 0.0
      %1154 = vmatprep.subr.mxu0 0.0
      %1155 = vmatpush1.msra.mxu0 0.0
      %1156 = vmatprep.subr.mxu0 0.0
      %1157 = vmatpush1.msra.mxu0 0.0
      %1158 = vmatprep.subr.mxu0 0.0
      %1159 = vmatpush1.msra.mxu0 0.0
      %1160 = vmatprep.subr.mxu0 0.0
      %1161 = vmatpush1.msra.mxu0 0.0
      %1162 = vmatprep.subr.mxu0 0.0
      %1163 = vmatpush1.msra.mxu0 0.0
      %1164 = vmatprep.subr.mxu0 0.0
      %1165 = vmatpush1.msra.mxu0 0.0
      %1166 = vmatprep.subr.mxu0 0.0
      %1167 = vmatpush1.msra.mxu0 0.0
      %1168 = vmatprep.subr.mxu0 0.0
      %1169 = vmatpush1.msra.mxu0 0.0
      %1170 = vmatprep.subr.mxu0 0.0
      %1171 = vmatpush1.msra.mxu0 0.0
      %1172 = vmatprep.subr.mxu0 0.0
      %1173 = vmatpush1.msra.mxu0 0.0
      %1174 = vmatprep.subr.mxu0 0.0
      %1175 = vmatpush1.msra.mxu0 0.0
      %1176 = vmatprep.subr.mxu0 0.0
      %1177 = vmatpush1.msra.mxu0 0.0
      %1178 = vmatprep.subr.mxu0 0.0
      %1179 = vmatpush1.msra.mxu0 0.0
      %1180 = vmatprep.subr.mxu0 0.0
      %1181 = vmatpush1.msra.mxu0 0.0
      %1182 = vmatprep.subr.mxu0 0.0
      %1183 = vmatpush1.msra.mxu0 0.0
      %1184 = vmatprep.mubr.f32.mxu0 0.0
      %1185 = vmatmul.mubr.f32.gmra.mrb[0].mxu0 %v1115
      %v1186 = vpop.f32.mrb[0].mxu0
      %v1187 = vadd.f32 %v1107, %v1186
      %v1188 = vpop.f32.mrb[0].mxu0
      %v1189 = vadd.f32 %v1107, %v1188
      %1190 = vmatprep.mubr.f32.mxu0 0.0
      %1191 = vmatmul.mubr.f32.gmra.mrb[0].mxu0 %v1118
      %v1192 = vpop.f32.mrb[0].mxu0
      %v1193 = vadd.f32 %v1112, %v1192
      %v1194 = vpop.f32.mrb[0].mxu0
      %v1195 = vadd.f32 %v1112, %v1194
      %1196 = vdwg.mxu0
      %vm1197 = vcmp.ge.f32.partialorder %v1187, 0.0
      %vm1198 = vcmp.ge.f32.partialorder %v1189, 0.0
      %vm1199 = vcmp.ge.f32.partialorder %v1193, 0.0
      %vm1200 = vcmp.ge.f32.partialorder %v1195, 0.0
      %v1201 = vmul.f32 %v1187, 0.01
      %v1202 = vmul.f32 %v1189, 0.01
      %v1203 = vmul.f32 %v1193, 0.01
      %v1204 = vmul.f32 %v1195, 0.01
      %v1205 = vsel %vm1197, %v1187, %v1201
      %v1206 = vsel %vm1198, %v1189, %v1202
      %v1207 = vsel %vm1199, %v1193, %v1203
      %v1208 = vsel %vm1200, %v1195, %v1204
      %v1209 = vld [vmem:[%s9] sm:$0xff]
      %v1210 = vld [vmem:[%s9 + $0x8] sm:$0xf]
      %v1211 = vld [vmem:[%s10] sm:$0xff]
      %v1212 = vld [vmem:[%s10 + $0x8] sm:$0xf]
      %1214 = vset.pattern.permute.xlu0 0
      %1215 = vperm.xlu0 %1214, %v1211
      %v1216 = vpop.permute.xlu0 %1215
      %1219 = vset.pattern.permute.xlu0 0
      %1220 = vperm.xlu0 %1219, %v1212
      %v1221 = vpop.permute.xlu0 %1220
      %v1224 = vsel %vm1008, %v1209, 0
      %v1227 = vsel %vm1008, %v1210, 0
      %1229 = vmatprep.subr.mxu0 %v1206
      %1230 = vmatpush1.msra.mxu0 %v1205
      %1231 = vmatprep.subr.mxu0 %v1208
      %1232 = vmatpush1.msra.mxu0 %v1207
      %1233 = vmatprep.subr.mxu0 0.0
      %1234 = vmatpush1.msra.mxu0 0.0
      %1235 = vmatprep.subr.mxu0 0.0
      %1236 = vmatpush1.msra.mxu0 0.0
      %1237 = vmatprep.subr.mxu0 0.0
      %1238 = vmatpush1.msra.mxu0 0.0
      %1239 = vmatprep.subr.mxu0 0.0
      %1240 = vmatpush1.msra.mxu0 0.0
      %1241 = vmatprep.subr.mxu0 0.0
      %1242 = vmatpush1.msra.mxu0 0.0
      %1243 = vmatprep.subr.mxu0 0.0
      %1244 = vmatpush1.msra.mxu0 0.0
      %1245 = vmatprep.subr.mxu0 0.0
      %1246 = vmatpush1.msra.mxu0 0.0
      %1247 = vmatprep.subr.mxu0 0.0
      %1248 = vmatpush1.msra.mxu0 0.0
      %1249 = vmatprep.subr.mxu0 0.0
      %1250 = vmatpush1.msra.mxu0 0.0
      %1251 = vmatprep.subr.mxu0 0.0
      %1252 = vmatpush1.msra.mxu0 0.0
      %1253 = vmatprep.subr.mxu0 0.0
      %1254 = vmatpush1.msra.mxu0 0.0
      %1255 = vmatprep.subr.mxu0 0.0
      %1256 = vmatpush1.msra.mxu0 0.0
      %1257 = vmatprep.subr.mxu0 0.0
      %1258 = vmatpush1.msra.mxu0 0.0
      %1259 = vmatprep.subr.mxu0 0.0
      %1260 = vmatpush1.msra.mxu0 0.0
      %1261 = vmatprep.subr.mxu0 0.0
      %1262 = vmatpush1.msra.mxu0 0.0
      %1263 = vmatprep.subr.mxu0 0.0
      %1264 = vmatpush1.msra.mxu0 0.0
      %1265 = vmatprep.subr.mxu0 0.0
      %1266 = vmatpush1.msra.mxu0 0.0
      %1267 = vmatprep.subr.mxu0 0.0
      %1268 = vmatpush1.msra.mxu0 0.0
      %1269 = vmatprep.subr.mxu0 0.0
      %1270 = vmatpush1.msra.mxu0 0.0
      %1271 = vmatprep.subr.mxu0 0.0
      %1272 = vmatpush1.msra.mxu0 0.0
      %1273 = vmatprep.subr.mxu0 0.0
      %1274 = vmatpush1.msra.mxu0 0.0
      %1275 = vmatprep.subr.mxu0 0.0
      %1276 = vmatpush1.msra.mxu0 0.0
      %1277 = vmatprep.subr.mxu0 0.0
      %1278 = vmatpush1.msra.mxu0 0.0
      %1279 = vmatprep.subr.mxu0 0.0
      %1280 = vmatpush1.msra.mxu0 0.0
      %1281 = vmatprep.subr.mxu0 0.0
      %1282 = vmatpush1.msra.mxu0 0.0
      %1283 = vmatprep.subr.mxu0 0.0
      %1284 = vmatpush1.msra.mxu0 0.0
      %1285 = vmatprep.subr.mxu0 0.0
      %1286 = vmatpush1.msra.mxu0 0.0
      %1287 = vmatprep.subr.mxu0 0.0
      %1288 = vmatpush1.msra.mxu0 0.0
      %1289 = vmatprep.subr.mxu0 0.0
      %1290 = vmatpush1.msra.mxu0 0.0
      %1291 = vmatprep.subr.mxu0 0.0
      %1292 = vmatpush1.msra.mxu0 0.0
      %1293 = vmatprep.mubr.f32.mxu0 0.0
      %1294 = vmatmul.mubr.f32.gmra.mrb[0].mxu0 %v1224
      %v1295 = vpop.f32.mrb[0].mxu0
      %v1296 = vadd.f32 %v1216, %v1295
      %v1297 = vpop.f32.mrb[0].mxu0
      %v1298 = vadd.f32 %v1216, %v1297
      %1299 = vmatprep.mubr.f32.mxu0 0.0
      %1300 = vmatmul.mubr.f32.gmra.mrb[0].mxu0 %v1227
      %v1301 = vpop.f32.mrb[0].mxu0
      %v1302 = vadd.f32 %v1221, %v1301
      %v1303 = vpop.f32.mrb[0].mxu0
      %v1304 = vadd.f32 %v1221, %v1303
      %1305 = vdwg.mxu0
      %1306 = vst [vmem:[%s623] sm:$0xff] %v1296
      %1307 = vst [vmem:[%s623 + $0x8] sm:$0xff] %v1298
      %1308 = vst [vmem:[%s623 + $0x10] sm:$0xf] %v1302
      %1309 = vst [vmem:[%s623 + $0x18] sm:$0xf] %v1304
      %v1310 = vld [vmem:[%s11] sm:$0xff]
      %v1311 = vld [vmem:[%s11 + $0x8] sm:$0xf]
      %v1312 = vld [vmem:[%s12] sm:$0xff]
      %v1313 = vld [vmem:[%s12 + $0x8] sm:$0xf]
      %1315 = vset.pattern.permute.xlu0 0
      %1316 = vperm.xlu0 %1315, %v1312
      %v1317 = vpop.permute.xlu0 %1316
      %1320 = vset.pattern.permute.xlu0 0
      %1321 = vperm.xlu0 %1320, %v1313
      %v1322 = vpop.permute.xlu0 %1321
      %v1325 = vsel %vm704, %v1310, 0
      %v1328 = vsel %vm704, %v1311, 0
      %1330 = vmatprep.subr.mxu0 %v888
      %1331 = vmatpush1.msra.mxu0 %v887
      %1332 = vmatprep.subr.mxu0 %v890
      %1333 = vmatpush1.msra.mxu0 %v889
      %1334 = vmatprep.subr.mxu0 %v892
      %1335 = vmatpush1.msra.mxu0 %v891
      %1336 = vmatprep.subr.mxu0 0.0
      %1337 = vmatpush1.msra.mxu0 0.0
      %1338 = vmatprep.subr.mxu0 0.0
      %1339 = vmatpush1.msra.mxu0 0.0
      %1340 = vmatprep.subr.mxu0 0.0
      %1341 = vmatpush1.msra.mxu0 0.0
      %1342 = vmatprep.subr.mxu0 0.0
      %1343 = vmatpush1.msra.mxu0 0.0
      %1344 = vmatprep.subr.mxu0 0.0
      %1345 = vmatpush1.msra.mxu0 0.0
      %1346 = vmatprep.subr.mxu0 0.0
      %1347 = vmatpush1.msra.mxu0 0.0
      %1348 = vmatprep.subr.mxu0 0.0
      %1349 = vmatpush1.msra.mxu0 0.0
      %1350 = vmatprep.subr.mxu0 0.0
      %1351 = vmatpush1.msra.mxu0 0.0
      %1352 = vmatprep.subr.mxu0 0.0
      %1353 = vmatpush1.msra.mxu0 0.0
      %1354 = vmatprep.subr.mxu0 0.0
      %1355 = vmatpush1.msra.mxu0 0.0
      %1356 = vmatprep.subr.mxu0 0.0
      %1357 = vmatpush1.msra.mxu0 0.0
      %1358 = vmatprep.subr.mxu0 0.0
      %1359 = vmatpush1.msra.mxu0 0.0
      %1360 = vmatprep.subr.mxu0 0.0
      %1361 = vmatpush1.msra.mxu0 0.0
      %1362 = vmatprep.subr.mxu0 0.0
      %1363 = vmatpush1.msra.mxu0 0.0
      %1364 = vmatprep.subr.mxu0 0.0
      %1365 = vmatpush1.msra.mxu0 0.0
      %1366 = vmatprep.subr.mxu0 0.0
      %1367 = vmatpush1.msra.mxu0 0.0
      %1368 = vmatprep.subr.mxu0 0.0
      %1369 = vmatpush1.msra.mxu0 0.0
      %1370 = vmatprep.subr.mxu0 0.0
      %1371 = vmatpush1.msra.mxu0 0.0
      %1372 = vmatprep.subr.mxu0 0.0
      %1373 = vmatpush1.msra.mxu0 0.0
      %1374 = vmatprep.subr.mxu0 0.0
      %1375 = vmatpush1.msra.mxu0 0.0
      %1376 = vmatprep.subr.mxu0 0.0
      %1377 = vmatpush1.msra.mxu0 0.0
      %1378 = vmatprep.subr.mxu0 0.0
      %1379 = vmatpush1.msra.mxu0 0.0
      %1380 = vmatprep.subr.mxu0 0.0
      %1381 = vmatpush1.msra.mxu0 0.0
      %1382 = vmatprep.subr.mxu0 0.0
      %1383 = vmatpush1.msra.mxu0 0.0
      %1384 = vmatprep.subr.mxu0 0.0
      %1385 = vmatpush1.msra.mxu0 0.0
      %1386 = vmatprep.subr.mxu0 0.0
      %1387 = vmatpush1.msra.mxu0 0.0
      %1388 = vmatprep.subr.mxu0 0.0
      %1389 = vmatpush1.msra.mxu0 0.0
      %1390 = vmatprep.subr.mxu0 0.0
      %1391 = vmatpush1.msra.mxu0 0.0
      %1392 = vmatprep.subr.mxu0 0.0
      %1393 = vmatpush1.msra.mxu0 0.0
      %1394 = vmatprep.mubr.f32.mxu0 0.0
      %1395 = vmatmul.mubr.f32.gmra.mrb[0].mxu0 %v1325
      %v1396 = vpop.f32.mrb[0].mxu0
      %v1397 = vadd.f32 %v1317, %v1396
      %v1398 = vpop.f32.mrb[0].mxu0
      %v1399 = vadd.f32 %v1317, %v1398
      %1400 = vmatprep.mubr.f32.mxu0 0.0
      %1401 = vmatmul.mubr.f32.gmra.mrb[0].mxu0 %v1328
      %v1402 = vpop.f32.mrb[0].mxu0
      %v1403 = vadd.f32 %v1322, %v1402
      %v1404 = vpop.f32.mrb[0].mxu0
      %v1405 = vadd.f32 %v1322, %v1404
      %1406 = vdwg.mxu0
      %vm1407 = vcmp.ge.f32.partialorder %v1397, 0.0
      %vm1408 = vcmp.ge.f32.partialorder %v1399, 0.0
      %vm1409 = vcmp.ge.f32.partialorder %v1403, 0.0
      %vm1410 = vcmp.ge.f32.partialorder %v1405, 0.0
      %v1411 = vmul.f32 %v1397, 0.01
      %v1412 = vmul.f32 %v1399, 0.01
      %v1413 = vmul.f32 %v1403, 0.01
      %v1414 = vmul.f32 %v1405, 0.01
      %v1415 = vsel %vm1407, %v1397, %v1411
      %v1416 = vsel %vm1408, %v1399, %v1412
      %v1417 = vsel %vm1409, %v1403, %v1413
      %v1418 = vsel %vm1410, %v1405, %v1414
      %v1419 = vld [vmem:[%s13] sm:$0xff]
      %v1420 = vld [vmem:[%s13 + $0x8] sm:$0xf]
      %v1421 = vld [vmem:[%s14] sm:$0xff]
      %v1422 = vld [vmem:[%s14 + $0x8] sm:$0xf]
      %1424 = vset.pattern.permute.xlu0 0
      %1425 = vperm.xlu0 %1424, %v1421
      %v1426 = vpop.permute.xlu0 %1425
      %1429 = vset.pattern.permute.xlu0 0
      %1430 = vperm.xlu0 %1429, %v1422
      %v1431 = vpop.permute.xlu0 %1430
      %vm1433 = vcmask 97280
      %v1435 = vsel %vm1433, %v1419, 0
      %v1438 = vsel %vm1433, %v1420, 0
      %vm1440 = vcmask 1043456
      %v1442 = vsel %vm1440, %v1417, 0
      %v1445 = vsel %vm1440, %v1418, 0
      %1447 = vmatprep.subr.mxu0 %v1416
      %1448 = vmatpush1.msra.mxu0 %v1415
      %1449 = vmatprep.subr.mxu0 %v1445
      %1450 = vmatpush1.msra.mxu0 %v1442
      %1451 = vmatprep.subr.mxu0 0.0
      %1452 = vmatpush1.msra.mxu0 0.0
      %1453 = vmatprep.subr.mxu0 0.0
      %1454 = vmatpush1.msra.mxu0 0.0
      %1455 = vmatprep.subr.mxu0 0.0
      %1456 = vmatpush1.msra.mxu0 0.0
      %1457 = vmatprep.subr.mxu0 0.0
      %1458 = vmatpush1.msra.mxu0 0.0
      %1459 = vmatprep.subr.mxu0 0.0
      %1460 = vmatpush1.msra.mxu0 0.0
      %1461 = vmatprep.subr.mxu0 0.0
      %1462 = vmatpush1.msra.mxu0 0.0
      %1463 = vmatprep.subr.mxu0 0.0
      %1464 = vmatpush1.msra.mxu0 0.0
      %1465 = vmatprep.subr.mxu0 0.0
      %1466 = vmatpush1.msra.mxu0 0.0
      %1467 = vmatprep.subr.mxu0 0.0
      %1468 = vmatpush1.msra.mxu0 0.0
      %1469 = vmatprep.subr.mxu0 0.0
      %1470 = vmatpush1.msra.mxu0 0.0
      %1471 = vmatprep.subr.mxu0 0.0
      %1472 = vmatpush1.msra.mxu0 0.0
      %1473 = vmatprep.subr.mxu0 0.0
      %1474 = vmatpush1.msra.mxu0 0.0
      %1475 = vmatprep.subr.mxu0 0.0
      %1476 = vmatpush1.msra.mxu0 0.0
      %1477 = vmatprep.subr.mxu0 0.0
      %1478 = vmatpush1.msra.mxu0 0.0
      %1479 = vmatprep.subr.mxu0 0.0
      %1480 = vmatpush1.msra.mxu0 0.0
      %1481 = vmatprep.subr.mxu0 0.0
      %1482 = vmatpush1.msra.mxu0 0.0
      %1483 = vmatprep.subr.mxu0 0.0
      %1484 = vmatpush1.msra.mxu0 0.0
      %1485 = vmatprep.subr.mxu0 0.0
      %1486 = vmatpush1.msra.mxu0 0.0
      %1487 = vmatprep.subr.mxu0 0.0
      %1488 = vmatpush1.msra.mxu0 0.0
      %1489 = vmatprep.subr.mxu0 0.0
      %1490 = vmatpush1.msra.mxu0 0.0
      %1491 = vmatprep.subr.mxu0 0.0
      %1492 = vmatpush1.msra.mxu0 0.0
      %1493 = vmatprep.subr.mxu0 0.0
      %1494 = vmatpush1.msra.mxu0 0.0
      %1495 = vmatprep.subr.mxu0 0.0
      %1496 = vmatpush1.msra.mxu0 0.0
      %1497 = vmatprep.subr.mxu0 0.0
      %1498 = vmatpush1.msra.mxu0 0.0
      %1499 = vmatprep.subr.mxu0 0.0
      %1500 = vmatpush1.msra.mxu0 0.0
      %1501 = vmatprep.subr.mxu0 0.0
      %1502 = vmatpush1.msra.mxu0 0.0
      %1503 = vmatprep.subr.mxu0 0.0
      %1504 = vmatpush1.msra.mxu0 0.0
      %1505 = vmatprep.subr.mxu0 0.0
      %1506 = vmatpush1.msra.mxu0 0.0
      %1507 = vmatprep.subr.mxu0 0.0
      %1508 = vmatpush1.msra.mxu0 0.0
      %1509 = vmatprep.subr.mxu0 0.0
      %1510 = vmatpush1.msra.mxu0 0.0
      %1511 = vmatprep.mubr.f32.mxu0 0.0
      %1512 = vmatmul.mubr.f32.gmra.mrb[0].mxu0 %v1435
      %v1513 = vpop.f32.mrb[0].mxu0
      %v1514 = vadd.f32 %v1426, %v1513
      %v1515 = vpop.f32.mrb[0].mxu0
      %v1516 = vadd.f32 %v1426, %v1515
      %1517 = vmatprep.mubr.f32.mxu0 0.0
      %1518 = vmatmul.mubr.f32.gmra.mrb[0].mxu0 %v1438
      %v1519 = vpop.f32.mrb[0].mxu0
      %v1520 = vadd.f32 %v1431, %v1519
      %v1521 = vpop.f32.mrb[0].mxu0
      %v1522 = vadd.f32 %v1431, %v1521
      %1523 = vdwg.mxu0
      %v1526 = vrot.slane %v1514, 4
      %v1527 = vrot.slane %v1516, 4
      %v1530 = vmax.f32 %v1514, %v1526
      %v1531 = vmax.f32 %v1516, %v1527
      %v1532 = vmax.f32 %v1530, %v1520
      %v1533 = vmax.f32 %v1531, %v1522
      %v1536 = vrot.slane %v1532, 4
      %v1537 = vrot.slane %v1533, 4
      %v1540 = vsel %vm1440, %v1532, %v1536
      %v1541 = vsel %vm1440, %v1533, %v1537
      %v1542 = vsub.f32 %v1514, %v1540
      %v1543 = vsub.f32 %v1516, %v1541
      %v1544 = vsub.f32 %v1520, %v1532
      %v1545 = vsub.f32 %v1522, %v1533
      %v1546 = vmul.f32 %v1542, 1.442695
      %v1547 = vpow.pop %v1546
      %v1548 = vmul.f32 %v1543, 1.442695
      %v1549 = vpow.pop %v1548
      %v1550 = vmul.f32 %v1544, 1.442695
      %v1551 = vpow.pop %v1550
      %v1552 = vmul.f32 %v1545, 1.442695
      %v1553 = vpow.pop %v1552
      %v1556 = vrot.slane %v1547, 4
      %v1557 = vrot.slane %v1549, 4
      %v1560 = vadd.f32 %v1547, %v1556
      %v1561 = vadd.f32 %v1549, %v1557
      %v1562 = vadd.f32 %v1560, %v1551
      %v1563 = vadd.f32 %v1561, %v1553
      %v1564 = vrcp.pop %v1562
      %v1565 = vmul.f32 1.0, %v1564
      %v1566 = vrcp.pop %v1563
      %v1567 = vmul.f32 1.0, %v1566
      %v1570 = vrot.slane %v1565, 4
      %v1571 = vrot.slane %v1567, 4
      %v1574 = vsel %vm1440, %v1565, %v1570
      %v1575 = vsel %vm1440, %v1567, %v1571
      %v1576 = vmul.f32 %v1547, %v1574
      %v1577 = vmul.f32 %v1549, %v1575
      %v1578 = vmul.f32 %v1551, %v1565
      %v1579 = vmul.f32 %v1553, %v1567
      %1580 = vst [vmem:[%s633] sm:$0xff] %v1576
      %1581 = vst [vmem:[%s633 + $0x8] sm:$0xff] %v1577
      %1582 = vst [vmem:[%s633 + $0x10] sm:$0xf] %v1578
      %1583 = vst [vmem:[%s633 + $0x18] sm:$0xf] %v1579
      %s1584 = smul.u32 2, %s34
      %p1585 = scmp.lt.s32.totalorder %s33, 1
      %s1586 = scalar_select %p1585, %s33, 1
      %p1587 = scmp.lt.s32.totalorder %s1584, 1
      %s1588 = scalar_select %p1587, %s1584, 1
      %s1589 = smul.addr %s1586, 4
      %s1590 = sadd.s32 %s1588, %s1589
      %s1591 = smul.addr %s1590, 8
      %s1592 = scalar_lea.vmem %s15, %s1591
      %s1593 = smul.u32 2, %s34
      %p1594 = scmp.lt.s32.totalorder %s33, 1
      %s1595 = scalar_select %p1594, %s33, 1
      %p1596 = scmp.lt.s32.totalorder %s1593, 1
      %s1597 = scalar_select %p1596, %s1593, 1
      %s1598 = smul.addr %s1595, 4
      %s1599 = sadd.s32 %s1597, %s1598
      %s1600 = smul.addr %s1599, 8
      %s1601 = scalar_lea.vmem %s16, %s1600
      %s1602 = smul.u32 2, %s34
      %p1603 = scmp.lt.s32.totalorder %s33, 1
      %s1604 = scalar_select %p1603, %s33, 1
      %p1605 = scmp.lt.s32.totalorder %s1602, 1
      %s1606 = scalar_select %p1605, %s1602, 1
      %s1607 = smul.addr %s1604, 4
      %s1608 = sadd.s32 %s1606, %s1607
      %s1609 = smul.addr %s1608, 8
      %s1610 = scalar_lea.vmem %s17, %s1609
      // Predicated region
      $region81: #{tpu_custom_call.1} parent=79 // pred_check
        %p1611 = pneg %p383
      $region82: #{tpu_custom_call.1} parent=79 // pred_check_branch
        %1613 = sbr.rel (%p1611) target = $region84
      $region83: #{tpu_custom_call.1} parent=79 // pred_region
        %s1614 = smul.u32 2, %s34
      $region84: #{tpu_custom_call.1} parent=79 // pred_fallthru
        _
      // Predicated region
      $region85: #{tpu_custom_call.1} parent=79 // pred_check
        %p1615 = pneg %p411
      $region86: #{tpu_custom_call.1} parent=79 // pred_check_branch
        %1617 = sbr.rel (%p1615) target = $region88
      $region87: #{tpu_custom_call.1} parent=79 // pred_region
        %s1618 = smul.u32 2, %s34
      $region88: #{tpu_custom_call.1} parent=79 // pred_fallthru
        _
      // Predicated region
      $region89: #{tpu_custom_call.1} parent=79 // pred_check
        %p1619 = pneg %p439
      $region90: #{tpu_custom_call.1} parent=79 // pred_check_branch
        %1621 = sbr.rel (%p1619) target = $region92
      $region91: #{tpu_custom_call.1} parent=79 // pred_region
        %s1622 = smul.u32 2, %s34
      $region92: #{tpu_custom_call.1} parent=79 // pred_fallthru
        _
    $region80: #{tpu_custom_call.1} parent=5 // pred_fallthru
      _
    %p1623 = scmp.le.s32.totalorder 2, %s24
    // Predicated region
    $region93: #{tpu_custom_call.1} parent=5 // pred_check
      %p1624 = pneg %p1623
    $region94: #{tpu_custom_call.1} parent=5 // pred_check_branch
      %1626 = sbr.rel (%p1624) target = $region96
    $region95: #{tpu_custom_call.1} parent=5 // pred_region
      %s1627 = ssub.s32 %s24, 2
      // Predicated region
      $region97: #{tpu_custom_call.1} parent=95 // pred_check
        %p1628 = pneg %p389
      $region98: #{tpu_custom_call.1} parent=95 // pred_check_branch
        %1630 = sbr.rel (%p1628) target = $region100
      $region99: #{tpu_custom_call.1} parent=95 // pred_region
        %s1631 = smul.u32 2, %s36
        %p1632 = scmp.lt.s32.totalorder %s35, 1
        %s1633 = scalar_select %p1632, %s35, 1
        %p1634 = scmp.lt.s32.totalorder %s1631, 1
        %s1635 = scalar_select %p1634, %s1631, 1
        %s1636 = smul.addr %s1633, 4
        %s1637 = sadd.s32 %s1635, %s1636
        %s1638 = smul.addr %s1637, 8
        %s1639 = scalar_lea.vmem %s15, %s1638
      $region100: #{tpu_custom_call.1} parent=95 // pred_fallthru
        _
      // Predicated region
      $region101: #{tpu_custom_call.1} parent=95 // pred_check
        %p1640 = pneg %p417
      $region102: #{tpu_custom_call.1} parent=95 // pred_check_branch
        %1642 = sbr.rel (%p1640) target = $region104
      $region103: #{tpu_custom_call.1} parent=95 // pred_region
        %s1643 = smul.u32 2, %s36
        %p1644 = scmp.lt.s32.totalorder %s35, 1
        %s1645 = scalar_select %p1644, %s35, 1
        %p1646 = scmp.lt.s32.totalorder %s1643, 1
        %s1647 = scalar_select %p1646, %s1643, 1
        %s1648 = smul.addr %s1645, 4
        %s1649 = sadd.s32 %s1647, %s1648
        %s1650 = smul.addr %s1649, 8
        %s1651 = scalar_lea.vmem %s16, %s1650
      $region104: #{tpu_custom_call.1} parent=95 // pred_fallthru
        _
      // Predicated region
      $region105: #{tpu_custom_call.1} parent=95 // pred_check
        %p1652 = pneg %p445
      $region106: #{tpu_custom_call.1} parent=95 // pred_check_branch
        %1654 = sbr.rel (%p1652) target = $region108
      $region107: #{tpu_custom_call.1} parent=95 // pred_region
        %s1655 = smul.u32 2, %s36
        %p1656 = scmp.lt.s32.totalorder %s35, 1
        %s1657 = scalar_select %p1656, %s35, 1
        %p1658 = scmp.lt.s32.totalorder %s1655, 1
        %s1659 = scalar_select %p1658, %s1655, 1
        %s1660 = smul.addr %s1657, 4
        %s1661 = sadd.s32 %s1659, %s1660
        %s1662 = smul.addr %s1661, 8
        %s1663 = scalar_lea.vmem %s17, %s1662
      $region108: #{tpu_custom_call.1} parent=95 // pred_fallthru
        _
    $region96: #{tpu_custom_call.1} parent=5 // pred_fallthru
      _
  $region6: #{tpu_custom_call.1} parent=0 // loop_footer
    %s28 = sadd.s32 1, %s24
  $region7: #{tpu_custom_call.1} parent=0 // loop_footer_branch
    %23 = sbr.rel target = $region3
  $region8: #{tpu_custom_call.1} parent=0 // loop_exit
    _

</llo_original>
